<compile_context>
chip_gen: v7x
topology: tpu7x:2x2x1
jax: 0.10.0
libtpu: 0.0.40
codegen_flags: <defaults>
</compile_context>

<pallas_src>
import math
from functools import partial

import jax
import jax.numpy as jnp
from jax import lax
from jax.experimental import pallas as pl
from jax.experimental.pallas import tpu as pltpu


def _exact_gelu(x):
    # Matches PyTorch F.gelu default (erf-based, not tanh approximation).
    return 0.5 * x * (1.0 + lax.erf(x * (1.0 / math.sqrt(2.0))))


# ----------------------------------------------------------------------------
# pltpu.roll sign/availability probe (cached).  Guarantees the W-shift
# direction is correct regardless of the rotate convention, and falls back to
# a concatenate-based circular shift if roll does not lower for this shape.
# ----------------------------------------------------------------------------
_ROLL_CACHE = {}


def _probe_roll(rows, lanes):
    key_ = (rows, lanes)
    if key_ in _ROLL_CACHE:
        return _ROLL_CACHE[key_]

    def probe_kernel(x_ref, o_ref):
        o_ref[...] = pltpu.roll(x_ref[...], 1, 0)

    x = jnp.broadcast_to(
        jnp.arange(rows, dtype=jnp.float32)[:, None], (rows, lanes))
    try:
        y = pl.pallas_call(
            probe_kernel,
            out_shape=jax.ShapeDtypeStruct((rows, lanes), jnp.float32),
        )(x)
        if bool(jnp.array_equal(y, jnp.roll(x, 1, 0))):
            res = (True, 1, rows - 1)        # jnp.roll convention
        elif bool(jnp.array_equal(y, jnp.roll(x, -1, 0))):
            res = (True, rows - 1, 1)        # flipped convention
        else:
            res = (False, 0, 0)
    except Exception:
        res = (False, 0, 0)
    _ROLL_CACHE[key_] = res
    return res


def _choose_tile_h(H, Wp, hid, cin, c_out, budget_bytes):
    """Largest H-tile dividing H whose rough per-step working set fits budget."""
    def est_bytes(th):
        rows_in = (th + 2) * Wp
        rows_out = th * Wp
        io = 2 * 4 * (rows_in * cin + rows_out * c_out)      # double-buffered I/O
        live = 4 * hid * 2 * (3 * rows_in + 2 * rows_out)    # y + 2 shifts + z/gate, both halves
        return io + live

    best = 1
    for th in range(1, H + 1):
        if H % th == 0 and est_bytes(th) <= budget_bytes:
            best = th
    return best


# ----------------------------------------------------------------------------
# Kernel
# ----------------------------------------------------------------------------
def _ffn_kernel(x_ref, w_in1_ref, w_in2_ref, w_dw1_ref, w_dw2_ref,
                b_dw1_ref, b_dw2_ref, w_out_ref, b_out_ref, o_ref,
                *, mm_dtype, use_roll, shift_m, shift_p):
    tHp, Wp, Cin = x_ref.shape              # (tile_h + 2, padded W, C + 1)
    tile_h = tHp - 2
    rows_in = tHp * Wp
    rows_out = tile_h * Wp

    # Free reshape (Wp is a multiple of 8): pixels on sublanes, channels on lanes.
    x = x_ref[...].reshape(rows_in, Cin).astype(mm_dtype)

    def half(w_in_ref, w_dw_ref, b_dw_ref):
        # 1x1 conv on the MXU; bias rides in the matmul via the ones channel so
        # zero-padded pixels stay exactly zero (the dwconv's zero padding).
        y = jnp.dot(x, w_in_ref[...].astype(mm_dtype),
                    preferred_element_type=jnp.float32)        # (rows_in, hid) f32

        # +/-1 column shifts of the row-major pixel axis (XLU rolls).  The
        # circular wrap only touches padded garbage columns, which are stripped
        # by the wrapper.
        if use_roll:
            y_m = pltpu.roll(y, shift_m, 0)   # y_m[r] = y[r - 1]  (column j-1)
            y_p = pltpu.roll(y, shift_p, 0)   # y_p[r] = y[r + 1]  (column j+1)
        else:
            y_m = jnp.concatenate([y[-1:], y[:-1]], axis=0)
            y_p = jnp.concatenate([y[1:], y[:1]], axis=0)

        w = w_dw_ref[...]                     # (9, hid); row = ky*3 + kx
        taps = (y_m, y, y_p)

        # Depthwise 3x3: accumulator initialized with the center tap + bias
        # (no zero fill).  Row slices below are sublane-tile aligned because
        # Wp % 8 == 0.
        z = y[Wp:Wp + rows_out] * w[4:5] + b_dw_ref[...]
        for ky in range(3):
            for kx in range(3):
                if ky == 1 and kx == 1:
                    continue
                k = ky * 3 + kx
                z = z + taps[kx][ky * Wp:ky * Wp + rows_out] * w[k:k + 1]
        return z                              # (rows_out, hid) f32

    z1 = half(w_in1_ref, w_dw1_ref, b_dw1_ref)
    z2 = half(w_in2_ref, w_dw2_ref, b_dw2_ref)

    g = _exact_gelu(z1) * z2                  # f32 gate (matches PyTorch erf GELU)

    out = jnp.dot(g.astype(mm_dtype), w_out_ref[...].astype(mm_dtype),
                  preferred_element_type=jnp.float32)
    out = out + b_out_ref[...]
    o_ref[...] = out.reshape(o_ref.shape).astype(o_ref.dtype)


# ----------------------------------------------------------------------------
# Wrapper
# ----------------------------------------------------------------------------
def feed_forward(x_nchw, params, *, tile_h=None, mm_dtype=jnp.float32,
                 vmem_budget_bytes=6 * 1024 * 1024):
    """x_nchw: (N, C, H, W) float32. Returns (N, C, H, W)."""
    N, C, H, W = x_nchw.shape
    two_hid = params["w_in"].shape[1]
    hid = two_hid // 2
    Cin = C + 1

    # Padded width: 1 zero column left, >=1 right, rounded up to a multiple of
    # 8 so sublane slices / rolls / reshapes stay tile-aligned.
    Wp = ((W + 2 + 7) // 8) * 8

    if tile_h is None:
        tile_h = _choose_tile_h(H, Wp, hid, Cin, C, vmem_budget_bytes)
    if H % tile_h != 0:
        raise ValueError(f"tile_h={tile_h} must divide H={H}")
    nH = H // tile_h
    tHp = tile_h + 2

    # --- layout prep (one XLA pass over x) ----------------------------------
    x = jnp.transpose(x_nchw, (0, 2, 3, 1))                       # NHWC
    x = jnp.concatenate([x, jnp.ones((N, H, W, 1), x.dtype)], axis=-1)
    x = jnp.pad(x, ((0, 0), (1, 1), (1, Wp - (W + 1)), (0, 0)))   # zero halo/borders
    # Overlapping H tiles (1-row halo on each side) so grid blocks are disjoint.
    x_tiles = jnp.stack(
        [x[:, i * tile_h:i * tile_h + tHp] for i in range(nH)], axis=1)
    # (N, nH, tile_h + 2, Wp, C + 1)

    # --- weights in kernel layout: bias folded into matmul, halves split ----
    w_in_aug = jnp.concatenate([params["w_in"], params["b_in"][None, :]], axis=0)
    w_in1, w_in2 = w_in_aug[:, :hid], w_in_aug[:, hid:]            # (C+1, hid)
    w_dw = params["w_dw"].reshape(9, two_hid)
    w_dw1, w_dw2 = w_dw[:, :hid], w_dw[:, hid:]                    # (9, hid)
    b_dw1 = params["b_dw"][:hid].reshape(1, hid)
    b_dw2 = params["b_dw"][hid:].reshape(1, hid)
    w_out = params["w_out"]                                        # (hid, C)
    b_out = params["b_out"].reshape(1, C)

    rows_in = tHp * Wp
    use_roll, shift_m, shift_p = _probe_roll(rows_in, hid)

    kernel = partial(_ffn_kernel, mm_dtype=mm_dtype, use_roll=use_roll,
                     shift_m=shift_m, shift_p=shift_p)

    out_padded = pl.pallas_call(
        kernel,
        out_shape=jax.ShapeDtypeStruct((N, H, Wp, C), x_nchw.dtype),
        grid=(N, nH),
        in_specs=[
            pl.BlockSpec((None, None, tHp, Wp, Cin), lambda n, i: (n, i, 0, 0, 0)),
            pl.BlockSpec((Cin, hid), lambda n, i: (0, 0)),   # project_in w, half 1
            pl.BlockSpec((Cin, hid), lambda n, i: (0, 0)),   # project_in w, half 2
            pl.BlockSpec((9, hid), lambda n, i: (0, 0)),     # dwconv w, half 1
            pl.BlockSpec((9, hid), lambda n, i: (0, 0)),     # dwconv w, half 2
            pl.BlockSpec((1, hid), lambda n, i: (0, 0)),     # dwconv b, half 1
            pl.BlockSpec((1, hid), lambda n, i: (0, 0)),     # dwconv b, half 2
            pl.BlockSpec((hid, C), lambda n, i: (0, 0)),     # project_out w
            pl.BlockSpec((1, C), lambda n, i: (0, 0)),       # project_out b
        ],
        out_specs=pl.BlockSpec((None, tile_h, Wp, C), lambda n, i: (n, i, 0, 0)),
        compiler_params=pltpu.CompilerParams(
            dimension_semantics=("parallel", "parallel"),
            vmem_limit_bytes=32 * 1024 * 1024,
        ),
    )(x_tiles, w_in1, w_in2, w_dw1, w_dw2, b_dw1, b_dw2, w_out, b_out)

    # Strip the W zero-padding; fuses with the NHWC -> NCHW transpose.
    return jnp.transpose(out_padded[:, :, 1:W + 1, :], (0, 3, 1, 2))


# ----------------------------------------------------------------------------
# Pure-JAX reference (mirrors the PyTorch module) and parameters
# ----------------------------------------------------------------------------
def feed_forward_reference(x_nchw, params):
    x = jnp.transpose(x_nchw, (0, 2, 3, 1)).astype(jnp.float32)   # NHWC
    N, H, W, C = x.shape
    hid = params["w_out"].shape[0]
    y = jnp.einsum("nhwc,cf->nhwf", x, params["w_in"],
                   precision=lax.Precision.HIGHEST) + params["b_in"]
    yp = jnp.pad(y, ((0, 0), (1, 1), (1, 1), (0, 0)))
    z = jnp.zeros_like(y)
    for ky in range(3):
        for kx in range(3):
            z = z + yp[:, ky:ky + H, kx:kx + W, :] * params["w_dw"][ky, kx]
    z = z + params["b_dw"]
    x1, x2 = z[..., :hid], z[..., hid:]
    g = _exact_gelu(x1) * x2
    out = jnp.einsum("nhwk,kc->nhwc", g, params["w_out"],
                     precision=lax.Precision.HIGHEST) + params["b_out"]
    return jnp.transpose(out, (0, 3, 1, 2))


def init_params(key, dim, ffn_expansion_factor, bias=True):
    """Synthetic parameters.  PyTorch shapes -> kernel-neutral layouts:
      project_in.weight  (2*hid, dim, 1, 1) -> w_in  (dim, 2*hid)
      dwconv.weight      (2*hid, 1, 3, 3)   -> w_dw  (3, 3, 2*hid)
      project_out.weight (dim, hid, 1, 1)   -> w_out (hid, dim)
    """
    hid = int(dim * ffn_expansion_factor)
    two_hid = 2 * hid
    k = jax.random.split(key, 6)
    s = 0.3
    p = dict(
        w_in=s * jax.random.normal(k[0], (dim, two_hid), jnp.float32),
        b_in=s * jax.random.normal(k[1], (two_hid,), jnp.float32),
        w_dw=s * jax.random.normal(k[2], (3, 3, two_hid), jnp.float32),
        b_dw=s * jax.random.normal(k[3], (two_hid,), jnp.float32),
        w_out=s * jax.random.normal(k[4], (hid, dim), jnp.float32),
        b_out=s * jax.random.normal(k[5], (dim,), jnp.float32),
    )
    if not bias:
        p["b_in"] = jnp.zeros_like(p["b_in"])
        p["b_dw"] = jnp.zeros_like(p["b_dw"])
        p["b_out"] = jnp.zeros_like(p["b_out"])
    return p


if __name__ == "__main__":
    # FeedForward(dim=8, ffn_expansion_factor=2, bias=True)
    dim, ffn_factor = 8, 2.0
    N, H, W = 2, 16, 16

    key = jax.random.PRNGKey(0)
    kx, kp = jax.random.split(key)
    x = jax.random.normal(kx, (N, dim, H, W), jnp.float32)   # NCHW like PyTorch
    params = init_params(kp, dim, ffn_factor, bias=True)

    ref = feed_forward_reference(x, params)

    # f32 MXU operands (exact semantics of the PyTorch module), 2 H-tiles per image.
    y32 = feed_forward(x, params, tile_h=8, mm_dtype=jnp.float32)
    jax.block_until_ready(y32)
    assert y32.shape == (N, dim, H, W)
    err32 = float(jnp.max(jnp.abs(y32 - ref)))
    assert jnp.allclose(y32, ref, atol=1e-2, rtol=1e-2), \
        f"f32 kernel mismatch: max abs err {err32}"

    # bf16 MXU operands (v6e/v7x throughput path); f32 accumulate + f32 gate.
    ybf = feed_forward(x, params, tile_h=8, mm_dtype=jnp.bfloat16)
    jax.block_until_ready(ybf)
    errbf = float(jnp.max(jnp.abs(ybf - ref)))
    assert jnp.allclose(ybf, ref, atol=6e-2, rtol=6e-2), \
        f"bf16 kernel mismatch: max abs err {errbf}"

    print("KERNEL_OK")
</pallas_src>

<mosaic_0001>
module attributes {stable_mosaic.version = 11 : i64} {
  func.func @probe_kernel(%arg0: memref<240x16xf32, #tpu.memory_space<vmem>>, %arg1: memref<240x16xf32, #tpu.memory_space<vmem>>) attributes {dimension_semantics = [], scalar_prefetch = 0 : i64, scratch_operands = 0 : i64, tpu.core_type = #tpu.core_type<tc>} {
    %c0 = arith.constant 0 : index
    %c0_0 = arith.constant 0 : index
    %0 = vector.load %arg0[%c0, %c0_0] : memref<240x16xf32, #tpu.memory_space<vmem>>, vector<240x16xf32>
    %c1_i32 = arith.constant 1 : i32
    %1 = tpu.dynamic_rotate %0 by %c1_i32 dim 0 : vector<240x16xf32>, i32 -> vector<240x16xf32>
    %c0_1 = arith.constant 0 : index
    %c0_2 = arith.constant 0 : index
    %2 = vector.load %arg1[%c0_1, %c0_2] : memref<240x16xf32, #tpu.memory_space<vmem>>, vector<240x16xf32>
    tpu.vector_store %arg1[%c0_1, %c0_2], %1 {strides = array<i32>} : memref<240x16xf32, #tpu.memory_space<vmem>>, vector<240x16xf32>,
    return
  }
}

module attributes {stable_mosaic.version = 11 : i64} {
  func.func @_ffn_kernel(%arg0: i32, %arg1: i32, %arg2: memref<1x1x10x24x9xf32, #tpu.memory_space<vmem>>, %arg3: memref<9x16xf32, #tpu.memory_space<vmem>>, %arg4: memref<9x16xf32, #tpu.memory_space<vmem>>, %arg5: memref<9x16xf32, #tpu.memory_space<vmem>>, %arg6: memref<9x16xf32, #tpu.memory_space<vmem>>, %arg7: memref<1x16xf32, #tpu.memory_space<vmem>>, %arg8: memref<1x16xf32, #tpu.memory_space<vmem>>, %arg9: memref<16x8xf32, #tpu.memory_space<vmem>>, %arg10: memref<1x8xf32, #tpu.memory_space<vmem>>, %arg11: memref<1x8x24x8xf32, #tpu.memory_space<vmem>>) attributes {dimension_semantics = [#tpu.dimension_semantics<parallel>, #tpu.dimension_semantics<parallel>], iteration_bounds = array<i64: 2, 2>, scalar_prefetch = 0 : i64, scratch_operands = 0 : i64, tpu.core_type = #tpu.core_type<tc>, window_params = [{transform_indices = @transform_0, window_bounds = array<i64: 1, 1, 10, 24, 9>}, {pipeline_mode = #tpu.pipeline_mode<synchronous>, transform_indices = @transform_1, window_bounds = array<i64: 9, 16>}, {pipeline_mode = #tpu.pipeline_mode<synchronous>, transform_indices = @transform_2, window_bounds = array<i64: 9, 16>}, {pipeline_mode = #tpu.pipeline_mode<synchronous>, transform_indices = @transform_3, window_bounds = array<i64: 9, 16>}, {pipeline_mode = #tpu.pipeline_mode<synchronous>, transform_indices = @transform_4, window_bounds = array<i64: 9, 16>}, {pipeline_mode = #tpu.pipeline_mode<synchronous>, transform_indices = @transform_5, window_bounds = array<i64: 1, 16>}, {pipeline_mode = #tpu.pipeline_mode<synchronous>, transform_indices = @transform_6, window_bounds = array<i64: 1, 16>}, {pipeline_mode = #tpu.pipeline_mode<synchronous>, transform_indices = @transform_7, window_bounds = array<i64: 16, 8>}, {pipeline_mode = #tpu.pipeline_mode<synchronous>, transform_indices = @transform_8, window_bounds = array<i64: 1, 8>}, {transform_indices = @transform_9, window_bounds = array<i64: 1, 8, 24, 8>}]} {
    %c0 = arith.constant 0 : index
    %c0_0 = arith.constant 0 : index
    %c0_1 = arith.constant 0 : index
    %c0_2 = arith.constant 0 : index
    %c0_3 = arith.constant 0 : index
    %0 = vector.load %arg2[%c0, %c0_0, %c0_1, %c0_2, %c0_3] : memref<1x1x10x24x9xf32, #tpu.memory_space<vmem>>, vector<1x1x10x24x9xf32>
    %1 = vector.shape_cast %0 : vector<1x1x10x24x9xf32> to vector<10x24x9xf32>
    %2 = vector.shape_cast %1 : vector<10x24x9xf32> to vector<240x9xf32>
    %c0_4 = arith.constant 0 : index
    %c0_5 = arith.constant 0 : index
    %3 = vector.load %arg3[%c0_4, %c0_5] : memref<9x16xf32, #tpu.memory_space<vmem>>, vector<9x16xf32>
    %cst = arith.constant dense<0.000000e+00> : vector<240x16xf32>
    %4 = tpu.matmul %2, %3, %cst {dimension_numbers = #tpu.dot_dimension_numbers<[1], [0], [0], [1], [0, 0, 1, 1], [], []>} : vector<240x9xf32>, vector<9x16xf32>, vector<240x16xf32> -> vector<240x16xf32>
    %5 = vector.extract_strided_slice %4 {offsets = [239, 0], sizes = [1, 16], strides = [1, 1]} : vector<240x16xf32> to vector<1x16xf32>
    %6 = vector.extract_strided_slice %4 {offsets = [0, 0], sizes = [239, 16], strides = [1, 1]} : vector<240x16xf32> to vector<239x16xf32>
    %7 = tpu.concatenate %5, %6 in 0 : vector<1x16xf32>, vector<239x16xf32> -> vector<240x16xf32>
    %8 = vector.extract_strided_slice %4 {offsets = [1, 0], sizes = [239, 16], strides = [1, 1]} : vector<240x16xf32> to vector<239x16xf32>
    %9 = vector.extract_strided_slice %4 {offsets = [0, 0], sizes = [1, 16], strides = [1, 1]} : vector<240x16xf32> to vector<1x16xf32>
    %10 = tpu.concatenate %8, %9 in 0 : vector<239x16xf32>, vector<1x16xf32> -> vector<240x16xf32>
    %c0_6 = arith.constant 0 : index
    %c0_7 = arith.constant 0 : index
    %11 = vector.load %arg5[%c0_6, %c0_7] : memref<9x16xf32, #tpu.memory_space<vmem>>, vector<9x16xf32>
    %12 = vector.extract_strided_slice %4 {offsets = [24, 0], sizes = [192, 16], strides = [1, 1]} : vector<240x16xf32> to vector<192x16xf32>
    %13 = vector.extract_strided_slice %11 {offsets = [4, 0], sizes = [1, 16], strides = [1, 1]} : vector<9x16xf32> to vector<1x16xf32>
    %14 = vector.broadcast %13 : vector<1x16xf32> to vector<192x16xf32>
    %15 = arith.mulf %12, %14 : vector<192x16xf32>
    %c0_8 = arith.constant 0 : index
    %c0_9 = arith.constant 0 : index
    %16 = vector.load %arg7[%c0_8, %c0_9] : memref<1x16xf32, #tpu.memory_space<vmem>>, vector<1x16xf32>
    %17 = vector.broadcast %16 : vector<1x16xf32> to vector<192x16xf32>
    %18 = arith.addf %15, %17 : vector<192x16xf32>
    %19 = vector.extract_strided_slice %7 {offsets = [0, 0], sizes = [192, 16], strides = [1, 1]} : vector<240x16xf32> to vector<192x16xf32>
    %20 = vector.extract_strided_slice %11 {offsets = [0, 0], sizes = [1, 16], strides = [1, 1]} : vector<9x16xf32> to vector<1x16xf32>
    %21 = vector.broadcast %20 : vector<1x16xf32> to vector<192x16xf32>
    %22 = arith.mulf %19, %21 : vector<192x16xf32>
    %23 = arith.addf %18, %22 : vector<192x16xf32>
    %24 = vector.extract_strided_slice %4 {offsets = [0, 0], sizes = [192, 16], strides = [1, 1]} : vector<240x16xf32> to vector<192x16xf32>
    %25 = vector.extract_strided_slice %11 {offsets = [1, 0], sizes = [1, 16], strides = [1, 1]} : vector<9x16xf32> to vector<1x16xf32>
    %26 = vector.broadcast %25 : vector<1x16xf32> to vector<192x16xf32>
    %27 = arith.mulf %24, %26 : vector<192x16xf32>
    %28 = arith.addf %23, %27 : vector<192x16xf32>
    %29 = vector.extract_strided_slice %10 {offsets = [0, 0], sizes = [192, 16], strides = [1, 1]} : vector<240x16xf32> to vector<192x16xf32>
    %30 = vector.extract_strided_slice %11 {offsets = [2, 0], sizes = [1, 16], strides = [1, 1]} : vector<9x16xf32> to vector<1x16xf32>
    %31 = vector.broadcast %30 : vector<1x16xf32> to vector<192x16xf32>
    %32 = arith.mulf %29, %31 : vector<192x16xf32>
    %33 = arith.addf %28, %32 : vector<192x16xf32>
    %34 = vector.extract_strided_slice %7 {offsets = [24, 0], sizes = [192, 16], strides = [1, 1]} : vector<240x16xf32> to vector<192x16xf32>
    %35 = vector.extract_strided_slice %11 {offsets = [3, 0], sizes = [1, 16], strides = [1, 1]} : vector<9x16xf32> to vector<1x16xf32>
    %36 = vector.broadcast %35 : vector<1x16xf32> to vector<192x16xf32>
    %37 = arith.mulf %34, %36 : vector<192x16xf32>
    %38 = arith.addf %33, %37 : vector<192x16xf32>
    %39 = vector.extract_strided_slice %10 {offsets = [24, 0], sizes = [192, 16], strides = [1, 1]} : vector<240x16xf32> to vector<192x16xf32>
    %40 = vector.extract_strided_slice %11 {offsets = [5, 0], sizes = [1, 16], strides = [1, 1]} : vector<9x16xf32> to vector<1x16xf32>
    %41 = vector.broadcast %40 : vector<1x16xf32> to vector<192x16xf32>
    %42 = arith.mulf %39, %41 : vector<192x16xf32>
    %43 = arith.addf %38, %42 : vector<192x16xf32>
    %44 = vector.extract_strided_slice %7 {offsets = [48, 0], sizes = [192, 16], strides = [1, 1]} : vector<240x16xf32> to vector<192x16xf32>
    %45 = vector.extract_strided_slice %11 {offsets = [6, 0], sizes = [1, 16], strides = [1, 1]} : vector<9x16xf32> to vector<1x16xf32>
    %46 = vector.broadcast %45 : vector<1x16xf32> to vector<192x16xf32>
    %47 = arith.mulf %44, %46 : vector<192x16xf32>
    %48 = arith.addf %43, %47 : vector<192x16xf32>
    %49 = vector.extract_strided_slice %4 {offsets = [48, 0], sizes = [192, 16], strides = [1, 1]} : vector<240x16xf32> to vector<192x16xf32>
    %50 = vector.extract_strided_slice %11 {offsets = [7, 0], sizes = [1, 16], strides = [1, 1]} : vector<9x16xf32> to vector<1x16xf32>
    %51 = vector.broadcast %50 : vector<1x16xf32> to vector<192x16xf32>
    %52 = arith.mulf %49, %51 : vector<192x16xf32>
    %53 = arith.addf %48, %52 : vector<192x16xf32>
    %54 = vector.extract_strided_slice %10 {offsets = [48, 0], sizes = [192, 16], strides = [1, 1]} : vector<240x16xf32> to vector<192x16xf32>
    %55 = vector.extract_strided_slice %11 {offsets = [8, 0], sizes = [1, 16], strides = [1, 1]} : vector<9x16xf32> to vector<1x16xf32>
    %56 = vector.broadcast %55 : vector<1x16xf32> to vector<192x16xf32>
    %57 = arith.mulf %54, %56 : vector<192x16xf32>
    %58 = arith.addf %53, %57 : vector<192x16xf32>
    %c0_10 = arith.constant 0 : index
    %c0_11 = arith.constant 0 : index
    %59 = vector.load %arg4[%c0_10, %c0_11] : memref<9x16xf32, #tpu.memory_space<vmem>>, vector<9x16xf32>
    %cst_12 = arith.constant dense<0.000000e+00> : vector<240x16xf32>
    %60 = tpu.matmul %2, %59, %cst_12 {dimension_numbers = #tpu.dot_dimension_numbers<[1], [0], [0], [1], [0, 0, 1, 1], [], []>} : vector<240x9xf32>, vector<9x16xf32>, vector<240x16xf32> -> vector<240x16xf32>
    %61 = vector.extract_strided_slice %60 {offsets = [239, 0], sizes = [1, 16], strides = [1, 1]} : vector<240x16xf32> to vector<1x16xf32>
    %62 = vector.extract_strided_slice %60 {offsets = [0, 0], sizes = [239, 16], strides = [1, 1]} : vector<240x16xf32> to vector<239x16xf32>
    %63 = tpu.concatenate %61, %62 in 0 : vector<1x16xf32>, vector<239x16xf32> -> vector<240x16xf32>
    %64 = vector.extract_strided_slice %60 {offsets = [1, 0], sizes = [239, 16], strides = [1, 1]} : vector<240x16xf32> to vector<239x16xf32>
    %65 = vector.extract_strided_slice %60 {offsets = [0, 0], sizes = [1, 16], strides = [1, 1]} : vector<240x16xf32> to vector<1x16xf32>
    %66 = tpu.concatenate %64, %65 in 0 : vector<239x16xf32>, vector<1x16xf32> -> vector<240x16xf32>
    %c0_13 = arith.constant 0 : index
    %c0_14 = arith.constant 0 : index
    %67 = vector.load %arg6[%c0_13, %c0_14] : memref<9x16xf32, #tpu.memory_space<vmem>>, vector<9x16xf32>
    %68 = vector.extract_strided_slice %60 {offsets = [24, 0], sizes = [192, 16], strides = [1, 1]} : vector<240x16xf32> to vector<192x16xf32>
    %69 = vector.extract_strided_slice %67 {offsets = [4, 0], sizes = [1, 16], strides = [1, 1]} : vector<9x16xf32> to vector<1x16xf32>
    %70 = vector.broadcast %69 : vector<1x16xf32> to vector<192x16xf32>
    %71 = arith.mulf %68, %70 : vector<192x16xf32>
    %c0_15 = arith.constant 0 : index
    %c0_16 = arith.constant 0 : index
    %72 = vector.load %arg8[%c0_15, %c0_16] : memref<1x16xf32, #tpu.memory_space<vmem>>, vector<1x16xf32>
    %73 = vector.broadcast %72 : vector<1x16xf32> to vector<192x16xf32>
    %74 = arith.addf %71, %73 : vector<192x16xf32>
    %75 = vector.extract_strided_slice %63 {offsets = [0, 0], sizes = [192, 16], strides = [1, 1]} : vector<240x16xf32> to vector<192x16xf32>
    %76 = vector.extract_strided_slice %67 {offsets = [0, 0], sizes = [1, 16], strides = [1, 1]} : vector<9x16xf32> to vector<1x16xf32>
    %77 = vector.broadcast %76 : vector<1x16xf32> to vector<192x16xf32>
    %78 = arith.mulf %75, %77 : vector<192x16xf32>
    %79 = arith.addf %74, %78 : vector<192x16xf32>
    %80 = vector.extract_strided_slice %60 {offsets = [0, 0], sizes = [192, 16], strides = [1, 1]} : vector<240x16xf32> to vector<192x16xf32>
    %81 = vector.extract_strided_slice %67 {offsets = [1, 0], sizes = [1, 16], strides = [1, 1]} : vector<9x16xf32> to vector<1x16xf32>
    %82 = vector.broadcast %81 : vector<1x16xf32> to vector<192x16xf32>
    %83 = arith.mulf %80, %82 : vector<192x16xf32>
    %84 = arith.addf %79, %83 : vector<192x16xf32>
    %85 = vector.extract_strided_slice %66 {offsets = [0, 0], sizes = [192, 16], strides = [1, 1]} : vector<240x16xf32> to vector<192x16xf32>
    %86 = vector.extract_strided_slice %67 {offsets = [2, 0], sizes = [1, 16], strides = [1, 1]} : vector<9x16xf32> to vector<1x16xf32>
    %87 = vector.broadcast %86 : vector<1x16xf32> to vector<192x16xf32>
    %88 = arith.mulf %85, %87 : vector<192x16xf32>
    %89 = arith.addf %84, %88 : vector<192x16xf32>
    %90 = vector.extract_strided_slice %63 {offsets = [24, 0], sizes = [192, 16], strides = [1, 1]} : vector<240x16xf32> to vector<192x16xf32>
    %91 = vector.extract_strided_slice %67 {offsets = [3, 0], sizes = [1, 16], strides = [1, 1]} : vector<9x16xf32> to vector<1x16xf32>
    %92 = vector.broadcast %91 : vector<1x16xf32> to vector<192x16xf32>
    %93 = arith.mulf %90, %92 : vector<192x16xf32>
    %94 = arith.addf %89, %93 : vector<192x16xf32>
    %95 = vector.extract_strided_slice %66 {offsets = [24, 0], sizes = [192, 16], strides = [1, 1]} : vector<240x16xf32> to vector<192x16xf32>
    %96 = vector.extract_strided_slice %67 {offsets = [5, 0], sizes = [1, 16], strides = [1, 1]} : vector<9x16xf32> to vector<1x16xf32>
    %97 = vector.broadcast %96 : vector<1x16xf32> to vector<192x16xf32>
    %98 = arith.mulf %95, %97 : vector<192x16xf32>
    %99 = arith.addf %94, %98 : vector<192x16xf32>
    %100 = vector.extract_strided_slice %63 {offsets = [48, 0], sizes = [192, 16], strides = [1, 1]} : vector<240x16xf32> to vector<192x16xf32>
    %101 = vector.extract_strided_slice %67 {offsets = [6, 0], sizes = [1, 16], strides = [1, 1]} : vector<9x16xf32> to vector<1x16xf32>
    %102 = vector.broadcast %101 : vector<1x16xf32> to vector<192x16xf32>
    %103 = arith.mulf %100, %102 : vector<192x16xf32>
    %104 = arith.addf %99, %103 : vector<192x16xf32>
    %105 = vector.extract_strided_slice %60 {offsets = [48, 0], sizes = [192, 16], strides = [1, 1]} : vector<240x16xf32> to vector<192x16xf32>
    %106 = vector.extract_strided_slice %67 {offsets = [7, 0], sizes = [1, 16], strides = [1, 1]} : vector<9x16xf32> to vector<1x16xf32>
    %107 = vector.broadcast %106 : vector<1x16xf32> to vector<192x16xf32>
    %108 = arith.mulf %105, %107 : vector<192x16xf32>
    %109 = arith.addf %104, %108 : vector<192x16xf32>
    %110 = vector.extract_strided_slice %66 {offsets = [48, 0], sizes = [192, 16], strides = [1, 1]} : vector<240x16xf32> to vector<192x16xf32>
    %111 = vector.extract_strided_slice %67 {offsets = [8, 0], sizes = [1, 16], strides = [1, 1]} : vector<9x16xf32> to vector<1x16xf32>
    %112 = vector.broadcast %111 : vector<1x16xf32> to vector<192x16xf32>
    %113 = arith.mulf %110, %112 : vector<192x16xf32>
    %114 = arith.addf %109, %113 : vector<192x16xf32>
    %cst_17 = arith.constant 5.000000e-01 : f32
    %115 = vector.broadcast %cst_17 : f32 to vector<192x16xf32>
    %116 = arith.mulf %115, %58 : vector<192x16xf32>
    %cst_18 = arith.constant 0.707106769 : f32
    %117 = vector.broadcast %cst_18 : f32 to vector<192x16xf32>
    %118 = arith.mulf %58, %117 : vector<192x16xf32>
    %119 = math.erf %118 : vector<192x16xf32>
    %cst_19 = arith.constant 1.000000e+00 : f32
    %120 = vector.broadcast %cst_19 : f32 to vector<192x16xf32>
    %121 = arith.addf %120, %119 : vector<192x16xf32>
    %122 = arith.mulf %116, %121 : vector<192x16xf32>
    %123 = arith.mulf %122, %114 : vector<192x16xf32>
    %c0_20 = arith.constant 0 : index
    %c0_21 = arith.constant 0 : index
    %124 = vector.load %arg9[%c0_20, %c0_21] : memref<16x8xf32, #tpu.memory_space<vmem>>, vector<16x8xf32>
    %cst_22 = arith.constant dense<0.000000e+00> : vector<192x8xf32>
    %125 = tpu.matmul %123, %124, %cst_22 {dimension_numbers = #tpu.dot_dimension_numbers<[1], [0], [0], [1], [0, 0, 1, 1], [], []>} : vector<192x16xf32>, vector<16x8xf32>, vector<192x8xf32> -> vector<192x8xf32>
    %c0_23 = arith.constant 0 : index
    %c0_24 = arith.constant 0 : index
    %126 = vector.load %arg10[%c0_23, %c0_24] : memref<1x8xf32, #tpu.memory_space<vmem>>, vector<1x8xf32>
    %127 = vector.broadcast %126 : vector<1x8xf32> to vector<192x8xf32>
    %128 = arith.addf %125, %127 : vector<192x8xf32>
    %129 = vector.shape_cast %128 : vector<192x8xf32> to vector<8x24x8xf32>
    %c0_25 = arith.constant 0 : index
    %c0_26 = arith.constant 0 : index
    %c0_27 = arith.constant 0 : index
    %c0_28 = arith.constant 0 : index
    %130 = vector.load %arg11[%c0_25, %c0_26, %c0_27, %c0_28] : memref<1x8x24x8xf32, #tpu.memory_space<vmem>>, vector<1x8x24x8xf32>
    %131 = vector.shape_cast %130 : vector<1x8x24x8xf32> to vector<8x24x8xf32>
    %132 = vector.shape_cast %129 : vector<8x24x8xf32> to vector<1x8x24x8xf32>
    tpu.vector_store %arg11[%c0_25, %c0_26, %c0_27, %c0_28], %132 {strides = array<i32>} : memref<1x8x24x8xf32, #tpu.memory_space<vmem>>, vector<1x8x24x8xf32>,
    return
  }
  func.func @transform_0(%arg0: i32, %arg1: i32) -> (i32, i32, i32, i32, i32) {
    %c0_i32 = arith.constant 0 : i32
    %c0_i32_0 = arith.constant 0 : i32
    %c0_i32_1 = arith.constant 0 : i32
    %c0_i32_2 = arith.constant 0 : i32
    return %arg0, %arg1, %c0_i32, %c0_i32_0, %c0_i32_1 : i32, i32, i32, i32, i32
  }
  func.func @transform_1(%arg0: i32, %arg1: i32) -> (i32, i32) {
    %c0_i32 = arith.constant 0 : i32
    %c0_i32_0 = arith.constant 0 : i32
    %c0_i32_1 = arith.constant 0 : i32
    return %c0_i32, %c0_i32_0 : i32, i32
  }
  func.func @transform_2(%arg0: i32, %arg1: i32) -> (i32, i32) {
    %c0_i32 = arith.constant 0 : i32
    %c0_i32_0 = arith.constant 0 : i32
    %c0_i32_1 = arith.constant 0 : i32
    return %c0_i32, %c0_i32_0 : i32, i32
  }
  func.func @transform_3(%arg0: i32, %arg1: i32) -> (i32, i32) {
    %c0_i32 = arith.constant 0 : i32
    %c0_i32_0 = arith.constant 0 : i32
    %c0_i32_1 = arith.constant 0 : i32
    return %c0_i32, %c0_i32_0 : i32, i32
  }
  func.func @transform_4(%arg0: i32, %arg1: i32) -> (i32, i32) {
    %c0_i32 = arith.constant 0 : i32
    %c0_i32_0 = arith.constant 0 : i32
    %c0_i32_1 = arith.constant 0 : i32
    return %c0_i32, %c0_i32_0 : i32, i32
  }
  func.func @transform_5(%arg0: i32, %arg1: i32) -> (i32, i32) {
    %c0_i32 = arith.constant 0 : i32
    %c0_i32_0 = arith.constant 0 : i32
    %c0_i32_1 = arith.constant 0 : i32
    return %c0_i32, %c0_i32_0 : i32, i32
  }
  func.func @transform_6(%arg0: i32, %arg1: i32) -> (i32, i32) {
    %c0_i32 = arith.constant 0 : i32
    %c0_i32_0 = arith.constant 0 : i32
    %c0_i32_1 = arith.constant 0 : i32
    return %c0_i32, %c0_i32_0 : i32, i32
  }
  func.func @transform_7(%arg0: i32, %arg1: i32) -> (i32, i32) {
    %c0_i32 = arith.constant 0 : i32
    %c0_i32_0 = arith.constant 0 : i32
    %c0_i32_1 = arith.constant 0 : i32
    return %c0_i32, %c0_i32_0 : i32, i32
  }
  func.func @transform_8(%arg0: i32, %arg1: i32) -> (i32, i32) {
    %c0_i32 = arith.constant 0 : i32
    %c0_i32_0 = arith.constant 0 : i32
    %c0_i32_1 = arith.constant 0 : i32
    return %c0_i32, %c0_i32_0 : i32, i32
  }
  func.func @transform_9(%arg0: i32, %arg1: i32) -> (i32, i32, i32, i32) {
    %c0_i32 = arith.constant 0 : i32
    %c0_i32_0 = arith.constant 0 : i32
    %c0_i32_1 = arith.constant 0 : i32
    return %arg0, %arg1, %c0_i32, %c0_i32_0 : i32, i32, i32, i32
  }
}

</mosaic_0001>

<llo_original>
// kernel: tpu_custom_call.1
$region0: #{tpu_custom_call.1}
  #allocation0 [shape = 'u32[]', space=smem, size = 0x4, offset = 0x4, fixed_abs, tag = 'smem constant byte address 0x4 - core index']
  #allocation1 [shape = 'u32[144,128]{1,0:T(1,128)}', space=vmem, size = 0x12000, scoped, tag = 'internal scratch']
  %s0 = inlined_call_operand.vmem [shape: f32[240,16], index: 0, kind: input, shape index: {}]
  %s1 = inlined_call_operand.vmem [shape: f32[240,16], index: 1, kind: output, shape index: {}]
  %s2 = sld [smem:[#allocation0]]
  $region14: #{tpu_custom_call.1} parent=0
    _
  %s4 = ssub.s32 1, %s2
  %s5 = scalar_select 0, %s4, %s2
  // Predicated region
  $region2: #{tpu_custom_call.1} parent=0 // pred_check
    _
  $region3: #{tpu_custom_call.1} parent=0 // pred_check_branch
    %7 = sbr.rel (0) target = $region5
  $region4: #{tpu_custom_call.1} parent=0 // pred_region
    _
  $region5: #{tpu_custom_call.1} parent=0 // pred_fallthru
    _
  %v8 = vld [vmem:[%s0] sm:$0xff]
  %v9 = vld [vmem:[%s0 + $0x8] sm:$0xff]
  %v10 = vld [vmem:[%s0 + $0x10] sm:$0xff]
  %v11 = vld [vmem:[%s0 + $0x18] sm:$0xff]
  %v12 = vld [vmem:[%s0 + $0x20] sm:$0xff]
  %v13 = vld [vmem:[%s0 + $0x28] sm:$0xff]
  %v14 = vld [vmem:[%s0 + $0x30] sm:$0xff]
  %v15 = vld [vmem:[%s0 + $0x38] sm:$0xff]
  %v16 = vld [vmem:[%s0 + $0x40] sm:$0xff]
  %v17 = vld [vmem:[%s0 + $0x48] sm:$0xff]
  %v18 = vld [vmem:[%s0 + $0x50] sm:$0xff]
  %v19 = vld [vmem:[%s0 + $0x58] sm:$0xff]
  %v20 = vld [vmem:[%s0 + $0x60] sm:$0xff]
  %v21 = vld [vmem:[%s0 + $0x68] sm:$0xff]
  %v22 = vld [vmem:[%s0 + $0x70] sm:$0xff]
  %v23 = vld [vmem:[%s0 + $0x78] sm:$0xff]
  %v24 = vld [vmem:[%s0 + $0x80] sm:$0xff]
  %v25 = vld [vmem:[%s0 + $0x88] sm:$0xff]
  %v26 = vld [vmem:[%s0 + $0x90] sm:$0xff]
  %v27 = vld [vmem:[%s0 + $0x98] sm:$0xff]
  %v28 = vld [vmem:[%s0 + $0xa0] sm:$0xff]
  %v29 = vld [vmem:[%s0 + $0xa8] sm:$0xff]
  %v30 = vld [vmem:[%s0 + $0xb0] sm:$0xff]
  %v31 = vld [vmem:[%s0 + $0xb8] sm:$0xff]
  %v32 = vld [vmem:[%s0 + $0xc0] sm:$0xff]
  %v33 = vld [vmem:[%s0 + $0xc8] sm:$0xff]
  %v34 = vld [vmem:[%s0 + $0xd0] sm:$0xff]
  %v35 = vld [vmem:[%s0 + $0xd8] sm:$0xff]
  %v36 = vld [vmem:[%s0 + $0xe0] sm:$0xff]
  %v37 = vld [vmem:[%s0 + $0xe8] sm:$0xff]
  %v38 = vrot.slane %v8, 7
  %v39 = vrot.slane %v9, 7
  %v40 = vrot.slane %v10, 7
  %v41 = vrot.slane %v11, 7
  %v42 = vrot.slane %v12, 7
  %v43 = vrot.slane %v13, 7
  %v44 = vrot.slane %v14, 7
  %v45 = vrot.slane %v15, 7
  %v46 = vrot.slane %v16, 7
  %v47 = vrot.slane %v17, 7
  %v48 = vrot.slane %v18, 7
  %v49 = vrot.slane %v19, 7
  %v50 = vrot.slane %v20, 7
  %v51 = vrot.slane %v21, 7
  %v52 = vrot.slane %v22, 7
  %v53 = vrot.slane %v23, 7
  %v54 = vrot.slane %v24, 7
  %v55 = vrot.slane %v25, 7
  %v56 = vrot.slane %v26, 7
  %v57 = vrot.slane %v27, 7
  %v58 = vrot.slane %v28, 7
  %v59 = vrot.slane %v29, 7
  %v60 = vrot.slane %v30, 7
  %v61 = vrot.slane %v31, 7
  %v62 = vrot.slane %v32, 7
  %v63 = vrot.slane %v33, 7
  %v64 = vrot.slane %v34, 7
  %v65 = vrot.slane %v35, 7
  %v66 = vrot.slane %v36, 7
  %v67 = vrot.slane %v37, 7
  %v68 = vlaneseq
  %v69 = vshrl.u32 %v68, 7
  %vm70 = vcmp.lt.s32.totalorder %v69, 1
  %v71 = vsel %vm70, %v66, %v67
  %v72 = vsel %vm70, %v65, %v66
  %v73 = vsel %vm70, %v64, %v65
  %v74 = vsel %vm70, %v63, %v64
  %v75 = vsel %vm70, %v62, %v63
  %v76 = vsel %vm70, %v61, %v62
  %v77 = vsel %vm70, %v60, %v61
  %v78 = vsel %vm70, %v59, %v60
  %v79 = vsel %vm70, %v58, %v59
  %v80 = vsel %vm70, %v57, %v58
  %v81 = vsel %vm70, %v56, %v57
  %v82 = vsel %vm70, %v55, %v56
  %v83 = vsel %vm70, %v54, %v55
  %v84 = vsel %vm70, %v53, %v54
  %v85 = vsel %vm70, %v52, %v53
  %v86 = vsel %vm70, %v51, %v52
  %v87 = vsel %vm70, %v50, %v51
  %v88 = vsel %vm70, %v49, %v50
  %v89 = vsel %vm70, %v48, %v49
  %v90 = vsel %vm70, %v47, %v48
  %v91 = vsel %vm70, %v46, %v47
  %v92 = vsel %vm70, %v45, %v46
  %v93 = vsel %vm70, %v44, %v45
  %v94 = vsel %vm70, %v43, %v44
  %v95 = vsel %vm70, %v42, %v43
  %v96 = vsel %vm70, %v41, %v42
  %v97 = vsel %vm70, %v40, %v41
  %v98 = vsel %vm70, %v39, %v40
  %v99 = vsel %vm70, %v38, %v39
  %v100 = vsel %vm70, %v67, %v38
  %vm101 = vcmask 130048
  %102 = vst.msk [vmem:[%s1] sm:$0xff] %vm101, %v100
  %103 = vst.msk [vmem:[%s1 + $0x8] sm:$0xff] %vm101, %v99
  %104 = vst.msk [vmem:[%s1 + $0x10] sm:$0xff] %vm101, %v98
  %105 = vst.msk [vmem:[%s1 + $0x18] sm:$0xff] %vm101, %v97
  %106 = vst.msk [vmem:[%s1 + $0x20] sm:$0xff] %vm101, %v96
  %107 = vst.msk [vmem:[%s1 + $0x28] sm:$0xff] %vm101, %v95
  %108 = vst.msk [vmem:[%s1 + $0x30] sm:$0xff] %vm101, %v94
  %109 = vst.msk [vmem:[%s1 + $0x38] sm:$0xff] %vm101, %v93
  %110 = vst.msk [vmem:[%s1 + $0x40] sm:$0xff] %vm101, %v92
  %111 = vst.msk [vmem:[%s1 + $0x48] sm:$0xff] %vm101, %v91
  %112 = vst.msk [vmem:[%s1 + $0x50] sm:$0xff] %vm101, %v90
  %113 = vst.msk [vmem:[%s1 + $0x58] sm:$0xff] %vm101, %v89
  %114 = vst.msk [vmem:[%s1 + $0x60] sm:$0xff] %vm101, %v88
  %115 = vst.msk [vmem:[%s1 + $0x68] sm:$0xff] %vm101, %v87
  %116 = vst.msk [vmem:[%s1 + $0x70] sm:$0xff] %vm101, %v86
  %117 = vst.msk [vmem:[%s1 + $0x78] sm:$0xff] %vm101, %v85
  %118 = vst.msk [vmem:[%s1 + $0x80] sm:$0xff] %vm101, %v84
  %119 = vst.msk [vmem:[%s1 + $0x88] sm:$0xff] %vm101, %v83
  %120 = vst.msk [vmem:[%s1 + $0x90] sm:$0xff] %vm101, %v82
  %121 = vst.msk [vmem:[%s1 + $0x98] sm:$0xff] %vm101, %v81
  %122 = vst.msk [vmem:[%s1 + $0xa0] sm:$0xff] %vm101, %v80
  %123 = vst.msk [vmem:[%s1 + $0xa8] sm:$0xff] %vm101, %v79
  %124 = vst.msk [vmem:[%s1 + $0xb0] sm:$0xff] %vm101, %v78
  %125 = vst.msk [vmem:[%s1 + $0xb8] sm:$0xff] %vm101, %v77
  %126 = vst.msk [vmem:[%s1 + $0xc0] sm:$0xff] %vm101, %v76
  %127 = vst.msk [vmem:[%s1 + $0xc8] sm:$0xff] %vm101, %v75
  %128 = vst.msk [vmem:[%s1 + $0xd0] sm:$0xff] %vm101, %v74
  %129 = vst.msk [vmem:[%s1 + $0xd8] sm:$0xff] %vm101, %v73
  %130 = vst.msk [vmem:[%s1 + $0xe0] sm:$0xff] %vm101, %v72
  %131 = vst.msk [vmem:[%s1 + $0xe8] sm:$0xff] %vm101, %v71
  // Predicated region
  $region6: #{tpu_custom_call.1} parent=0 // pred_check
    _
  $region7: #{tpu_custom_call.1} parent=0 // pred_check_branch
    %133 = sbr.rel (0) target = $region9
  $region8: #{tpu_custom_call.1} parent=0 // pred_region
    _
  $region9: #{tpu_custom_call.1} parent=0 // pred_fallthru
    _
  // Predicated region
  $region10: #{tpu_custom_call.1} parent=0 // pred_check
    _
  $region11: #{tpu_custom_call.1} parent=0 // pred_check_branch
    %135 = sbr.rel (0) target = $region13
  $region12: #{tpu_custom_call.1} parent=0 // pred_region
    _
  $region13: #{tpu_custom_call.1} parent=0 // pred_fallthru
    _

// kernel: tpu_custom_call.1
$region0: #{tpu_custom_call.1}
  #allocation0 [shape = 'u32[]', space=smem, size = 0x4, offset = 0x4, fixed_abs, tag = 'smem constant byte address 0x4 - core index']
  #allocation1 [shape = 'u32[144,128]{1,0:T(1,128)}', space=vmem, size = 0x12000, scoped, tag = 'internal scratch']
  %s0 = inlined_call_operand.vmem [shape: f32[2,2,10,24,9], index: 0, kind: input, shape index: {}]
  %s1 = inlined_call_operand.vmem [shape: f32[9,16], index: 1, kind: input, shape index: {}]
  %s2 = inlined_call_operand.vmem [shape: f32[9,16], index: 2, kind: input, shape index: {}]
  %s3 = inlined_call_operand.vmem [shape: f32[9,16], index: 3, kind: input, shape index: {}]
  %s4 = inlined_call_operand.vmem [shape: f32[9,16], index: 4, kind: input, shape index: {}]
  %s5 = inlined_call_operand.vmem [shape: f32[1,16], index: 5, kind: input, shape index: {}]
  %s6 = inlined_call_operand.vmem [shape: f32[1,16], index: 6, kind: input, shape index: {}]
  %s7 = inlined_call_operand.vmem [shape: f32[16,8], index: 7, kind: input, shape index: {}]
  %s8 = inlined_call_operand.vmem [shape: f32[1,8], index: 8, kind: input, shape index: {}]
  %s9 = inlined_call_operand.vmem [shape: f32[2,16,24,8], index: 9, kind: output, shape index: {}]
  %s10 = sld [smem:[#allocation0]]
  $region69: #{tpu_custom_call.1} parent=0
    _
  %s12 = ssub.s32 1, %s10
  %s13 = scalar_select 0, %s12, %s10
  loop: start=0, step=1, limit=6
  $region2: #{tpu_custom_call.1} parent=0 // loop_pre_header
    _
  $region3: #{tpu_custom_call.1} parent=0 // loop_header
    %s15 = sphi 0, %s19
    %p16 = scmp.ge.s32.totalorder %s15, 6
    %s22 = sphi 0, %s34
    %s23 = sphi 0, %s30
    %s24 = sphi 0, %s22
    %s25 = sphi 0, %s23
    %s26 = sphi 0, %s24
    %s27 = sphi 0, %s25
    %s39 = sphi 0, %s41
    %s42 = sphi 0, %s39
    %s43 = sphi 0, %s42
    %s59 = sphi 0, %s43
    %s63 = sphi 0, %s63
    %s65 = sphi 0, %s63
    %s66 = sphi 0, %s65
    %s80 = sphi 0, %s66
    %s84 = sphi 0, %s84
    %s86 = sphi 0, %s84
    %s87 = sphi 0, %s86
    %s101 = sphi 0, %s87
    %s105 = sphi 0, %s105
    %s107 = sphi 0, %s105
    %s108 = sphi 0, %s107
    %s122 = sphi 0, %s108
    %s126 = sphi 0, %s126
    %s128 = sphi 0, %s126
    %s129 = sphi 0, %s128
    %s143 = sphi 0, %s129
    %s147 = sphi 0, %s147
    %s149 = sphi 0, %s147
    %s150 = sphi 0, %s149
    %s164 = sphi 0, %s150
    %s168 = sphi 0, %s168
    %s170 = sphi 0, %s168
    %s171 = sphi 0, %s170
    %s185 = sphi 0, %s171
    %s189 = sphi 0, %s189
    %s191 = sphi 0, %s189
    %s192 = sphi 0, %s191
    %s206 = sphi 0, %s192
    %s210 = sphi 0, %s210
    %s212 = sphi 0, %s210
    %s213 = sphi 0, %s212
    %s227 = sphi 0, %s213
    %s235 = sphi 0, %s237
    %s238 = sphi 0, %s235
    %s239 = sphi 0, %s238
    %s255 = sphi 0, %s239
  $region4: #{tpu_custom_call.1} parent=0 // loop_header_branch
    %18 = sbr.rel (%p16) target = $region8
  $region5: #{tpu_custom_call.1} parent=0 // loop_body
    %s20 = ssub.s32 %s15, 1
    %s21 = ssub.s32 %s15, 2
    %s28 = sadd.s32 1, %s23
    %p29 = scmp.ge.s32.totalorder %s28, 2
    %s30 = scalar_select %p29, 0, %s28
    %s31 = sadd.s32 1, %s22
    %s32 = scalar_select %p29, %s31, %s22
    %p33 = scmp.ge.s32.totalorder %s32, 2
    %s34 = scalar_select %p33, 0, %s32
    %s35 = ssub.s32 %s22, %s34
    %s36 = ssub.s32 %s23, %s30
    %s37 = sor.u32 %s35, %s36
    %p38 = scmp.eq.s32.totalorder %s37, 0
    %s40 = sadd.s32 %s39, 1
    %s41 = scalar_select %p38, %s39, %s40
    %p44 = pneg %p38
    %p45 = scmp.eq.s32.totalorder %s15, 3
    %p46 = por %p44, %p45
    %p47 = scmp.ne.s32.totalorder %s39, %s42
    %p48 = scmp.eq.s32.totalorder %s15, 0
    %p49 = por %p47, %p48
    %p50 = scmp.ne.s32.totalorder %s39, %s42
    %p51 = scmp.eq.s32.totalorder %s20, 3
    %p52 = por %p50, %p51
    %p53 = scmp.ne.s32.totalorder %s42, %s43
    %p54 = scmp.eq.s32.totalorder %s20, 0
    %p55 = por %p53, %p54
    %p56 = scmp.ne.s32.totalorder %s42, %s43
    %p57 = scmp.eq.s32.totalorder %s21, 3
    %p58 = por %p56, %p57
    %p60 = scmp.ne.s32.totalorder %s43, %s59
    %p61 = scmp.eq.s32.totalorder %s21, 0
    %p62 = por %p60, %p61
    %s64 = sadd.s32 %s63, 1
    %p67 = scmp.eq.s32.totalorder %s15, 3
    %p68 = scmp.ne.s32.totalorder %s63, %s65
    %p69 = scmp.eq.s32.totalorder %s15, 0
    %p70 = por %p68, %p69
    %p71 = scmp.ne.s32.totalorder %s63, %s65
    %p72 = scmp.eq.s32.totalorder %s20, 3
    %p73 = por %p71, %p72
    %p74 = scmp.ne.s32.totalorder %s65, %s66
    %p75 = scmp.eq.s32.totalorder %s20, 0
    %p76 = por %p74, %p75
    %p77 = scmp.ne.s32.totalorder %s65, %s66
    %p78 = scmp.eq.s32.totalorder %s21, 3
    %p79 = por %p77, %p78
    %p81 = scmp.ne.s32.totalorder %s66, %s80
    %p82 = scmp.eq.s32.totalorder %s21, 0
    %p83 = por %p81, %p82
    %s85 = sadd.s32 %s84, 1
    %p88 = scmp.eq.s32.totalorder %s15, 3
    %p89 = scmp.ne.s32.totalorder %s84, %s86
    %p90 = scmp.eq.s32.totalorder %s15, 0
    %p91 = por %p89, %p90
    %p92 = scmp.ne.s32.totalorder %s84, %s86
    %p93 = scmp.eq.s32.totalorder %s20, 3
    %p94 = por %p92, %p93
    %p95 = scmp.ne.s32.totalorder %s86, %s87
    %p96 = scmp.eq.s32.totalorder %s20, 0
    %p97 = por %p95, %p96
    %p98 = scmp.ne.s32.totalorder %s86, %s87
    %p99 = scmp.eq.s32.totalorder %s21, 3
    %p100 = por %p98, %p99
    %p102 = scmp.ne.s32.totalorder %s87, %s101
    %p103 = scmp.eq.s32.totalorder %s21, 0
    %p104 = por %p102, %p103
    %s106 = sadd.s32 %s105, 1
    %p109 = scmp.eq.s32.totalorder %s15, 3
    %p110 = scmp.ne.s32.totalorder %s105, %s107
    %p111 = scmp.eq.s32.totalorder %s15, 0
    %p112 = por %p110, %p111
    %p113 = scmp.ne.s32.totalorder %s105, %s107
    %p114 = scmp.eq.s32.totalorder %s20, 3
    %p115 = por %p113, %p114
    %p116 = scmp.ne.s32.totalorder %s107, %s108
    %p117 = scmp.eq.s32.totalorder %s20, 0
    %p118 = por %p116, %p117
    %p119 = scmp.ne.s32.totalorder %s107, %s108
    %p120 = scmp.eq.s32.totalorder %s21, 3
    %p121 = por %p119, %p120
    %p123 = scmp.ne.s32.totalorder %s108, %s122
    %p124 = scmp.eq.s32.totalorder %s21, 0
    %p125 = por %p123, %p124
    %s127 = sadd.s32 %s126, 1
    %p130 = scmp.eq.s32.totalorder %s15, 3
    %p131 = scmp.ne.s32.totalorder %s126, %s128
    %p132 = scmp.eq.s32.totalorder %s15, 0
    %p133 = por %p131, %p132
    %p134 = scmp.ne.s32.totalorder %s126, %s128
    %p135 = scmp.eq.s32.totalorder %s20, 3
    %p136 = por %p134, %p135
    %p137 = scmp.ne.s32.totalorder %s128, %s129
    %p138 = scmp.eq.s32.totalorder %s20, 0
    %p139 = por %p137, %p138
    %p140 = scmp.ne.s32.totalorder %s128, %s129
    %p141 = scmp.eq.s32.totalorder %s21, 3
    %p142 = por %p140, %p141
    %p144 = scmp.ne.s32.totalorder %s129, %s143
    %p145 = scmp.eq.s32.totalorder %s21, 0
    %p146 = por %p144, %p145
    %s148 = sadd.s32 %s147, 1
    %p151 = scmp.eq.s32.totalorder %s15, 3
    %p152 = scmp.ne.s32.totalorder %s147, %s149
    %p153 = scmp.eq.s32.totalorder %s15, 0
    %p154 = por %p152, %p153
    %p155 = scmp.ne.s32.totalorder %s147, %s149
    %p156 = scmp.eq.s32.totalorder %s20, 3
    %p157 = por %p155, %p156
    %p158 = scmp.ne.s32.totalorder %s149, %s150
    %p159 = scmp.eq.s32.totalorder %s20, 0
    %p160 = por %p158, %p159
    %p161 = scmp.ne.s32.totalorder %s149, %s150
    %p162 = scmp.eq.s32.totalorder %s21, 3
    %p163 = por %p161, %p162
    %p165 = scmp.ne.s32.totalorder %s150, %s164
    %p166 = scmp.eq.s32.totalorder %s21, 0
    %p167 = por %p165, %p166
    %s169 = sadd.s32 %s168, 1
    %p172 = scmp.eq.s32.totalorder %s15, 3
    %p173 = scmp.ne.s32.totalorder %s168, %s170
    %p174 = scmp.eq.s32.totalorder %s15, 0
    %p175 = por %p173, %p174
    %p176 = scmp.ne.s32.totalorder %s168, %s170
    %p177 = scmp.eq.s32.totalorder %s20, 3
    %p178 = por %p176, %p177
    %p179 = scmp.ne.s32.totalorder %s170, %s171
    %p180 = scmp.eq.s32.totalorder %s20, 0
    %p181 = por %p179, %p180
    %p182 = scmp.ne.s32.totalorder %s170, %s171
    %p183 = scmp.eq.s32.totalorder %s21, 3
    %p184 = por %p182, %p183
    %p186 = scmp.ne.s32.totalorder %s171, %s185
    %p187 = scmp.eq.s32.totalorder %s21, 0
    %p188 = por %p186, %p187
    %s190 = sadd.s32 %s189, 1
    %p193 = scmp.eq.s32.totalorder %s15, 3
    %p194 = scmp.ne.s32.totalorder %s189, %s191
    %p195 = scmp.eq.s32.totalorder %s15, 0
    %p196 = por %p194, %p195
    %p197 = scmp.ne.s32.totalorder %s189, %s191
    %p198 = scmp.eq.s32.totalorder %s20, 3
    %p199 = por %p197, %p198
    %p200 = scmp.ne.s32.totalorder %s191, %s192
    %p201 = scmp.eq.s32.totalorder %s20, 0
    %p202 = por %p200, %p201
    %p203 = scmp.ne.s32.totalorder %s191, %s192
    %p204 = scmp.eq.s32.totalorder %s21, 3
    %p205 = por %p203, %p204
    %p207 = scmp.ne.s32.totalorder %s192, %s206
    %p208 = scmp.eq.s32.totalorder %s21, 0
    %p209 = por %p207, %p208
    %s211 = sadd.s32 %s210, 1
    %p214 = scmp.eq.s32.totalorder %s15, 3
    %p215 = scmp.ne.s32.totalorder %s210, %s212
    %p216 = scmp.eq.s32.totalorder %s15, 0
    %p217 = por %p215, %p216
    %p218 = scmp.ne.s32.totalorder %s210, %s212
    %p219 = scmp.eq.s32.totalorder %s20, 3
    %p220 = por %p218, %p219
    %p221 = scmp.ne.s32.totalorder %s212, %s213
    %p222 = scmp.eq.s32.totalorder %s20, 0
    %p223 = por %p221, %p222
    %p224 = scmp.ne.s32.totalorder %s212, %s213
    %p225 = scmp.eq.s32.totalorder %s21, 3
    %p226 = por %p224, %p225
    %p228 = scmp.ne.s32.totalorder %s213, %s227
    %p229 = scmp.eq.s32.totalorder %s21, 0
    %p230 = por %p228, %p229
    %s231 = ssub.s32 %s22, %s34
    %s232 = ssub.s32 %s23, %s30
    %s233 = sor.u32 %s231, %s232
    %p234 = scmp.eq.s32.totalorder %s233, 0
    %s236 = sadd.s32 %s235, 1
    %s237 = scalar_select %p234, %s235, %s236
    %p240 = pneg %p234
    %p241 = scmp.eq.s32.totalorder %s15, 3
    %p242 = por %p240, %p241
    %p243 = scmp.ne.s32.totalorder %s235, %s238
    %p244 = scmp.eq.s32.totalorder %s15, 0
    %p245 = por %p243, %p244
    %p246 = scmp.ne.s32.totalorder %s235, %s238
    %p247 = scmp.eq.s32.totalorder %s20, 3
    %p248 = por %p246, %p247
    %p249 = scmp.ne.s32.totalorder %s238, %s239
    %p250 = scmp.eq.s32.totalorder %s20, 0
    %p251 = por %p249, %p250
    %p252 = scmp.ne.s32.totalorder %s238, %s239
    %p253 = scmp.eq.s32.totalorder %s21, 3
    %p254 = por %p252, %p253
    %p256 = scmp.ne.s32.totalorder %s239, %s255
    %p257 = scmp.eq.s32.totalorder %s21, 0
    %p258 = por %p256, %p257
    %p259 = scmp.le.s32.totalorder 1, %s15
    %p260 = scmp.lt.s32.totalorder %s15, 5
    %p261 = pnand %p259, %p260
    %p262 = pneg %p261
    // Predicated region
    $region9: #{tpu_custom_call.1} parent=5 // pred_check
      _
    $region10: #{tpu_custom_call.1} parent=5 // pred_check_branch
      %264 = sbr.rel (%p261) target = $region12
    $region11: #{tpu_custom_call.1} parent=5 // pred_region
      %s265 = ssub.s32 %s15, 1
      // Predicated region
      $region13: #{tpu_custom_call.1} parent=11 // pred_check
        %p266 = pneg %p76
      $region14: #{tpu_custom_call.1} parent=11 // pred_check_branch
        %268 = sbr.rel (%p266) target = $region16
      $region15: #{tpu_custom_call.1} parent=11 // pred_region
        _
      $region16: #{tpu_custom_call.1} parent=11 // pred_fallthru
        _
      // Predicated region
      $region17: #{tpu_custom_call.1} parent=11 // pred_check
        %p269 = pneg %p97
      $region18: #{tpu_custom_call.1} parent=11 // pred_check_branch
        %271 = sbr.rel (%p269) target = $region20
      $region19: #{tpu_custom_call.1} parent=11 // pred_region
        _
      $region20: #{tpu_custom_call.1} parent=11 // pred_fallthru
        _
      // Predicated region
      $region21: #{tpu_custom_call.1} parent=11 // pred_check
        %p272 = pneg %p118
      $region22: #{tpu_custom_call.1} parent=11 // pred_check_branch
        %274 = sbr.rel (%p272) target = $region24
      $region23: #{tpu_custom_call.1} parent=11 // pred_region
        _
      $region24: #{tpu_custom_call.1} parent=11 // pred_fallthru
        _
      // Predicated region
      $region25: #{tpu_custom_call.1} parent=11 // pred_check
        %p275 = pneg %p139
      $region26: #{tpu_custom_call.1} parent=11 // pred_check_branch
        %277 = sbr.rel (%p275) target = $region28
      $region27: #{tpu_custom_call.1} parent=11 // pred_region
        _
      $region28: #{tpu_custom_call.1} parent=11 // pred_fallthru
        _
      // Predicated region
      $region29: #{tpu_custom_call.1} parent=11 // pred_check
        %p278 = pneg %p160
      $region30: #{tpu_custom_call.1} parent=11 // pred_check_branch
        %280 = sbr.rel (%p278) target = $region32
      $region31: #{tpu_custom_call.1} parent=11 // pred_region
        _
      $region32: #{tpu_custom_call.1} parent=11 // pred_fallthru
        _
      // Predicated region
      $region33: #{tpu_custom_call.1} parent=11 // pred_check
        %p281 = pneg %p181
      $region34: #{tpu_custom_call.1} parent=11 // pred_check_branch
        %283 = sbr.rel (%p281) target = $region36
      $region35: #{tpu_custom_call.1} parent=11 // pred_region
        _
      $region36: #{tpu_custom_call.1} parent=11 // pred_fallthru
        _
      // Predicated region
      $region37: #{tpu_custom_call.1} parent=11 // pred_check
        %p284 = pneg %p202
      $region38: #{tpu_custom_call.1} parent=11 // pred_check_branch
        %286 = sbr.rel (%p284) target = $region40
      $region39: #{tpu_custom_call.1} parent=11 // pred_region
        _
      $region40: #{tpu_custom_call.1} parent=11 // pred_fallthru
        _
      // Predicated region
      $region41: #{tpu_custom_call.1} parent=11 // pred_check
        %p287 = pneg %p223
      $region42: #{tpu_custom_call.1} parent=11 // pred_check_branch
        %289 = sbr.rel (%p287) target = $region44
      $region43: #{tpu_custom_call.1} parent=11 // pred_region
        _
      $region44: #{tpu_custom_call.1} parent=11 // pred_fallthru
        _
    $region12: #{tpu_custom_call.1} parent=5 // pred_fallthru
      _
    %p290 = scmp.lt.s32.totalorder %s15, 4
    // Predicated region
    $region45: #{tpu_custom_call.1} parent=5 // pred_check
      %p291 = pneg %p290
    $region46: #{tpu_custom_call.1} parent=5 // pred_check_branch
      %293 = sbr.rel (%p291) target = $region48
    $region47: #{tpu_custom_call.1} parent=5 // pred_region
      // Predicated region
      $region49: #{tpu_custom_call.1} parent=47 // pred_check
        %p294 = pneg %p49
      $region50: #{tpu_custom_call.1} parent=47 // pred_check_branch
        %296 = sbr.rel (%p294) target = $region52
      $region51: #{tpu_custom_call.1} parent=47 // pred_region
        %p297 = scmp.lt.s32.totalorder %s22, 1
        %s298 = scalar_select %p297, %s22, 1
        %p299 = scmp.lt.s32.totalorder %s23, 1
        %s300 = scalar_select %p299, %s23, 1
        %s301 = smul.addr %s300, 30
        %s302 = smul.addr %s298, 60
        %s303 = sadd.s32 %s301, %s302
        %s304 = smul.addr %s303, 8
        %s305 = scalar_lea.vmem %s0, %s304
      $region52: #{tpu_custom_call.1} parent=47 // pred_fallthru
        _
    $region48: #{tpu_custom_call.1} parent=5 // pred_fallthru
      _
    %p306 = scmp.le.s32.totalorder 1, %s15
    %p307 = scmp.lt.s32.totalorder %s15, 5
    %p308 = pnand %p306, %p307
    %p309 = pneg %p308
    // Predicated region
    $region53: #{tpu_custom_call.1} parent=5 // pred_check
      _
    $region54: #{tpu_custom_call.1} parent=5 // pred_check_branch
      %311 = sbr.rel (%p308) target = $region56
    $region55: #{tpu_custom_call.1} parent=5 // pred_region
      %s312 = ssub.s32 %s15, 1
      %p313 = scmp.lt.s32.totalorder %s24, 1
      %s314 = scalar_select %p313, %s24, 1
      %p315 = scmp.lt.s32.totalorder %s25, 1
      %s316 = scalar_select %p315, %s25, 1
      %s317 = smul.addr %s316, 30
      %s318 = smul.addr %s314, 60
      %s319 = sadd.s32 %s317, %s318
      %s320 = smul.addr %s319, 8
      %s321 = scalar_lea.vmem %s0, %s320
      %p322 = pneg %p55
      %p323 = pneg %p52
      %p324 = pneg %p76
      %p325 = pneg %p73
      %p326 = pneg %p97
      %p327 = pneg %p94
      %p328 = pneg %p118
      %p329 = pneg %p115
      %p330 = pneg %p139
      %p331 = pneg %p136
      %p332 = pneg %p160
      %p333 = pneg %p157
      %p334 = pneg %p181
      %p335 = pneg %p178
      %p336 = pneg %p202
      %p337 = pneg %p199
      %p338 = pneg %p223
      %p339 = pneg %p220
      %p340 = pneg %p251
      %p341 = pneg %p248
      %s342 = smul.u32 8, %s25
      %p343 = scmp.lt.s32.totalorder %s24, 1
      %s344 = scalar_select %p343, %s24, 1
      %p345 = scmp.lt.s32.totalorder %s342, 15
      %s346 = scalar_select %p345, %s342, 15
      %s347 = smul.addr %s346, 3
      %s348 = smul.addr %s344, 48
      %s349 = sadd.s32 %s347, %s348
      %s350 = smul.addr %s349, 8
      %s351 = scalar_lea.vmem %s9, %s350
      %p352 = scmp.lt.s32.totalorder %s24, 1
      %s353 = scalar_select %p352, %s24, 1
      %p354 = scmp.lt.s32.totalorder %s25, 1
      %s355 = scalar_select %p354, %s25, 1
      %s356 = smul.addr %s355, 30
      %s357 = smul.addr %s353, 60
      %s358 = sadd.s32 %s356, %s357
      %s359 = smul.addr %s358, 8
      %s360 = scalar_lea.vmem %s0, %s359
      %s361 = smul.u32 8, %s25
      %p362 = scmp.lt.s32.totalorder %s24, 1
      %s363 = scalar_select %p362, %s24, 1
      %p364 = scmp.lt.s32.totalorder %s361, 15
      %s365 = scalar_select %p364, %s361, 15
      %s366 = smul.addr %s365, 3
      %s367 = smul.addr %s363, 48
      %s368 = sadd.s32 %s366, %s367
      %s369 = smul.addr %s368, 8
      %s370 = scalar_lea.vmem %s9, %s369
      %s371 = smul.u32 8, %s25
      %v372 = vld [vmem:[%s360] sm:$0xff]
      %v373 = vld [vmem:[%s360 + $0x8] sm:$0xff]
      %v374 = vld [vmem:[%s360 + $0x10] sm:$0xff]
      %v375 = vld [vmem:[%s360 + $0x18] sm:$0xff]
      %v376 = vld [vmem:[%s360 + $0x20] sm:$0xff]
      %v377 = vld [vmem:[%s360 + $0x28] sm:$0xff]
      %v378 = vld [vmem:[%s360 + $0x30] sm:$0xff]
      %v379 = vld [vmem:[%s360 + $0x38] sm:$0xff]
      %v380 = vld [vmem:[%s360 + $0x40] sm:$0xff]
      %v381 = vld [vmem:[%s360 + $0x48] sm:$0xff]
      %v382 = vld [vmem:[%s360 + $0x50] sm:$0xff]
      %v383 = vld [vmem:[%s360 + $0x58] sm:$0xff]
      %v384 = vld [vmem:[%s360 + $0x60] sm:$0xff]
      %v385 = vld [vmem:[%s360 + $0x68] sm:$0xff]
      %v386 = vld [vmem:[%s360 + $0x70] sm:$0xff]
      %v387 = vld [vmem:[%s360 + $0x78] sm:$0xff]
      %v388 = vld [vmem:[%s360 + $0x80] sm:$0xff]
      %v389 = vld [vmem:[%s360 + $0x88] sm:$0xff]
      %v390 = vld [vmem:[%s360 + $0x90] sm:$0xff]
      %v391 = vld [vmem:[%s360 + $0x98] sm:$0xff]
      %v392 = vld [vmem:[%s360 + $0xa0] sm:$0xff]
      %v393 = vld [vmem:[%s360 + $0xa8] sm:$0xff]
      %v394 = vld [vmem:[%s360 + $0xb0] sm:$0xff]
      %v395 = vld [vmem:[%s360 + $0xb8] sm:$0xff]
      %v396 = vld [vmem:[%s360 + $0xc0] sm:$0xff]
      %v397 = vld [vmem:[%s360 + $0xc8] sm:$0xff]
      %v398 = vld [vmem:[%s360 + $0xd0] sm:$0xff]
      %v399 = vld [vmem:[%s360 + $0xd8] sm:$0xff]
      %v400 = vld [vmem:[%s360 + $0xe0] sm:$0xff]
      %v401 = vld [vmem:[%s360 + $0xe8] sm:$0xff]
      %v402 = vld [vmem:[%s1] sm:$0xff]
      %v403 = vld [vmem:[%s1 + $0x8] sm:$0x1]
      %vm404 = vcmask 72704
      %v406 = vsel %vm404, %v372, 0
      %v409 = vsel %vm404, %v373, 0
      %v412 = vsel %vm404, %v374, 0
      %v415 = vsel %vm404, %v375, 0
      %v418 = vsel %vm404, %v376, 0
      %v421 = vsel %vm404, %v377, 0
      %v424 = vsel %vm404, %v378, 0
      %v427 = vsel %vm404, %v379, 0
      %v430 = vsel %vm404, %v380, 0
      %v433 = vsel %vm404, %v381, 0
      %v436 = vsel %vm404, %v382, 0
      %v439 = vsel %vm404, %v383, 0
      %v442 = vsel %vm404, %v384, 0
      %v445 = vsel %vm404, %v385, 0
      %v448 = vsel %vm404, %v386, 0
      %v451 = vsel %vm404, %v387, 0
      %v454 = vsel %vm404, %v388, 0
      %v457 = vsel %vm404, %v389, 0
      %v460 = vsel %vm404, %v390, 0
      %v463 = vsel %vm404, %v391, 0
      %v466 = vsel %vm404, %v392, 0
      %v469 = vsel %vm404, %v393, 0
      %v472 = vsel %vm404, %v394, 0
      %v475 = vsel %vm404, %v395, 0
      %v478 = vsel %vm404, %v396, 0
      %v481 = vsel %vm404, %v397, 0
      %v484 = vsel %vm404, %v398, 0
      %v487 = vsel %vm404, %v399, 0
      %v490 = vsel %vm404, %v400, 0
      %v493 = vsel %vm404, %v401, 0
      %vm495 = vcmask 1040384
      %v497 = vsel %vm495, %v403, 0
      %499 = vmatprep.subr.mxu0 0.0
      %500 = vmatpush1.msra.mxu0 %v402
      %501 = vmatprep.subr.mxu0 0.0
      %502 = vmatpush1.msra.mxu0 %v497
      %503 = vmatprep.subr.mxu0 0.0
      %504 = vmatpush1.msra.mxu0 0.0
      %505 = vmatprep.subr.mxu0 0.0
      %506 = vmatpush1.msra.mxu0 0.0
      %507 = vmatprep.subr.mxu0 0.0
      %508 = vmatpush1.msra.mxu0 0.0
      %509 = vmatprep.subr.mxu0 0.0
      %510 = vmatpush1.msra.mxu0 0.0
      %511 = vmatprep.subr.mxu0 0.0
      %512 = vmatpush1.msra.mxu0 0.0
      %513 = vmatprep.subr.mxu0 0.0
      %514 = vmatpush1.msra.mxu0 0.0
      %515 = vmatprep.subr.mxu0 0.0
      %516 = vmatpush1.msra.mxu0 0.0
      %517 = vmatprep.subr.mxu0 0.0
      %518 = vmatpush1.msra.mxu0 0.0
      %519 = vmatprep.subr.mxu0 0.0
      %520 = vmatpush1.msra.mxu0 0.0
      %521 = vmatprep.subr.mxu0 0.0
      %522 = vmatpush1.msra.mxu0 0.0
      %523 = vmatprep.subr.mxu0 0.0
      %524 = vmatpush1.msra.mxu0 0.0
      %525 = vmatprep.subr.mxu0 0.0
      %526 = vmatpush1.msra.mxu0 0.0
      %527 = vmatprep.subr.mxu0 0.0
      %528 = vmatpush1.msra.mxu0 0.0
      %529 = vmatprep.subr.mxu0 0.0
      %530 = vmatpush1.msra.mxu0 0.0
      %531 = vmatprep.subr.mxu0 0.0
      %532 = vmatpush1.msra.mxu0 0.0
      %533 = vmatprep.subr.mxu0 0.0
      %534 = vmatpush1.msra.mxu0 0.0
      %535 = vmatprep.subr.mxu0 0.0
      %536 = vmatpush1.msra.mxu0 0.0
      %537 = vmatprep.subr.mxu0 0.0
      %538 = vmatpush1.msra.mxu0 0.0
      %539 = vmatprep.subr.mxu0 0.0
      %540 = vmatpush1.msra.mxu0 0.0
      %541 = vmatprep.subr.mxu0 0.0
      %542 = vmatpush1.msra.mxu0 0.0
      %543 = vmatprep.subr.mxu0 0.0
      %544 = vmatpush1.msra.mxu0 0.0
      %545 = vmatprep.subr.mxu0 0.0
      %546 = vmatpush1.msra.mxu0 0.0
      %547 = vmatprep.subr.mxu0 0.0
      %548 = vmatpush1.msra.mxu0 0.0
      %549 = vmatprep.subr.mxu0 0.0
      %550 = vmatpush1.msra.mxu0 0.0
      %551 = vmatprep.subr.mxu0 0.0
      %552 = vmatpush1.msra.mxu0 0.0
      %553 = vmatprep.subr.mxu0 0.0
      %554 = vmatpush1.msra.mxu0 0.0
      %555 = vmatprep.subr.mxu0 0.0
      %556 = vmatpush1.msra.mxu0 0.0
      %557 = vmatprep.subr.mxu0 0.0
      %558 = vmatpush1.msra.mxu0 0.0
      %559 = vmatprep.subr.mxu0 0.0
      %560 = vmatpush1.msra.mxu0 0.0
      %561 = vmatprep.subr.mxu0 0.0
      %562 = vmatpush1.msra.mxu0 0.0
      %563 = vmatprep.mubr.f32.mxu0 0.0
      %564 = vmatmul.mubr.f32.gmra.mrb[0].mxu0 %v406
      %v565 = vpop.f32.mrb[0].mxu0
      %v566 = vadd.f32 0.0, %v565
      %v567 = vpop.f32.mrb[0].mxu0
      %568 = vmatprep.mubr.f32.mxu0 0.0
      %569 = vmatmul.mubr.f32.gmra.mrb[0].mxu0 %v409
      %v570 = vpop.f32.mrb[0].mxu0
      %v571 = vadd.f32 0.0, %v570
      %v572 = vpop.f32.mrb[0].mxu0
      %573 = vmatprep.mubr.f32.mxu0 0.0
      %574 = vmatmul.mubr.f32.gmra.mrb[0].mxu0 %v412
      %v575 = vpop.f32.mrb[0].mxu0
      %v576 = vadd.f32 0.0, %v575
      %v577 = vpop.f32.mrb[0].mxu0
      %578 = vmatprep.mubr.f32.mxu0 0.0
      %579 = vmatmul.mubr.f32.gmra.mrb[0].mxu0 %v415
      %v580 = vpop.f32.mrb[0].mxu0
      %v581 = vadd.f32 0.0, %v580
      %v582 = vpop.f32.mrb[0].mxu0
      %583 = vmatprep.mubr.f32.mxu0 0.0
      %584 = vmatmul.mubr.f32.gmra.mrb[0].mxu0 %v418
      %v585 = vpop.f32.mrb[0].mxu0
      %v586 = vadd.f32 0.0, %v585
      %v587 = vpop.f32.mrb[0].mxu0
      %588 = vmatprep.mubr.f32.mxu0 0.0
      %589 = vmatmul.mubr.f32.gmra.mrb[0].mxu0 %v421
      %v590 = vpop.f32.mrb[0].mxu0
      %v591 = vadd.f32 0.0, %v590
      %v592 = vpop.f32.mrb[0].mxu0
      %593 = vmatprep.mubr.f32.mxu0 0.0
      %594 = vmatmul.mubr.f32.gmra.mrb[0].mxu0 %v424
      %v595 = vpop.f32.mrb[0].mxu0
      %v596 = vadd.f32 0.0, %v595
      %v597 = vpop.f32.mrb[0].mxu0
      %598 = vmatprep.mubr.f32.mxu0 0.0
      %599 = vmatmul.mubr.f32.gmra.mrb[0].mxu0 %v427
      %v600 = vpop.f32.mrb[0].mxu0
      %v601 = vadd.f32 0.0, %v600
      %v602 = vpop.f32.mrb[0].mxu0
      %603 = vmatprep.mubr.f32.mxu0 0.0
      %604 = vmatmul.mubr.f32.gmra.mrb[0].mxu0 %v430
      %v605 = vpop.f32.mrb[0].mxu0
      %v606 = vadd.f32 0.0, %v605
      %v607 = vpop.f32.mrb[0].mxu0
      %608 = vmatprep.mubr.f32.mxu0 0.0
      %609 = vmatmul.mubr.f32.gmra.mrb[0].mxu0 %v433
      %v610 = vpop.f32.mrb[0].mxu0
      %v611 = vadd.f32 0.0, %v610
      %v612 = vpop.f32.mrb[0].mxu0
      %613 = vmatprep.mubr.f32.mxu0 0.0
      %614 = vmatmul.mubr.f32.gmra.mrb[0].mxu0 %v436
      %v615 = vpop.f32.mrb[0].mxu0
      %v616 = vadd.f32 0.0, %v615
      %v617 = vpop.f32.mrb[0].mxu0
      %618 = vmatprep.mubr.f32.mxu0 0.0
      %619 = vmatmul.mubr.f32.gmra.mrb[0].mxu0 %v439
      %v620 = vpop.f32.mrb[0].mxu0
      %v621 = vadd.f32 0.0, %v620
      %v622 = vpop.f32.mrb[0].mxu0
      %623 = vmatprep.mubr.f32.mxu0 0.0
      %624 = vmatmul.mubr.f32.gmra.mrb[0].mxu0 %v442
      %v625 = vpop.f32.mrb[0].mxu0
      %v626 = vadd.f32 0.0, %v625
      %v627 = vpop.f32.mrb[0].mxu0
      %628 = vmatprep.mubr.f32.mxu0 0.0
      %629 = vmatmul.mubr.f32.gmra.mrb[0].mxu0 %v445
      %v630 = vpop.f32.mrb[0].mxu0
      %v631 = vadd.f32 0.0, %v630
      %v632 = vpop.f32.mrb[0].mxu0
      %633 = vmatprep.mubr.f32.mxu0 0.0
      %634 = vmatmul.mubr.f32.gmra.mrb[0].mxu0 %v448
      %v635 = vpop.f32.mrb[0].mxu0
      %v636 = vadd.f32 0.0, %v635
      %v637 = vpop.f32.mrb[0].mxu0
      %638 = vmatprep.mubr.f32.mxu0 0.0
      %639 = vmatmul.mubr.f32.gmra.mrb[0].mxu0 %v451
      %v640 = vpop.f32.mrb[0].mxu0
      %v641 = vadd.f32 0.0, %v640
      %v642 = vpop.f32.mrb[0].mxu0
      %643 = vmatprep.mubr.f32.mxu0 0.0
      %644 = vmatmul.mubr.f32.gmra.mrb[0].mxu0 %v454
      %v645 = vpop.f32.mrb[0].mxu0
      %v646 = vadd.f32 0.0, %v645
      %v647 = vpop.f32.mrb[0].mxu0
      %648 = vmatprep.mubr.f32.mxu0 0.0
      %649 = vmatmul.mubr.f32.gmra.mrb[0].mxu0 %v457
      %v650 = vpop.f32.mrb[0].mxu0
      %v651 = vadd.f32 0.0, %v650
      %v652 = vpop.f32.mrb[0].mxu0
      %653 = vmatprep.mubr.f32.mxu0 0.0
      %654 = vmatmul.mubr.f32.gmra.mrb[0].mxu0 %v460
      %v655 = vpop.f32.mrb[0].mxu0
      %v656 = vadd.f32 0.0, %v655
      %v657 = vpop.f32.mrb[0].mxu0
      %658 = vmatprep.mubr.f32.mxu0 0.0
      %659 = vmatmul.mubr.f32.gmra.mrb[0].mxu0 %v463
      %v660 = vpop.f32.mrb[0].mxu0
      %v661 = vadd.f32 0.0, %v660
      %v662 = vpop.f32.mrb[0].mxu0
      %663 = vmatprep.mubr.f32.mxu0 0.0
      %664 = vmatmul.mubr.f32.gmra.mrb[0].mxu0 %v466
      %v665 = vpop.f32.mrb[0].mxu0
      %v666 = vadd.f32 0.0, %v665
      %v667 = vpop.f32.mrb[0].mxu0
      %668 = vmatprep.mubr.f32.mxu0 0.0
      %669 = vmatmul.mubr.f32.gmra.mrb[0].mxu0 %v469
      %v670 = vpop.f32.mrb[0].mxu0
      %v671 = vadd.f32 0.0, %v670
      %v672 = vpop.f32.mrb[0].mxu0
      %673 = vmatprep.mubr.f32.mxu0 0.0
      %674 = vmatmul.mubr.f32.gmra.mrb[0].mxu0 %v472
      %v675 = vpop.f32.mrb[0].mxu0
      %v676 = vadd.f32 0.0, %v675
      %v677 = vpop.f32.mrb[0].mxu0
      %678 = vmatprep.mubr.f32.mxu0 0.0
      %679 = vmatmul.mubr.f32.gmra.mrb[0].mxu0 %v475
      %v680 = vpop.f32.mrb[0].mxu0
      %v681 = vadd.f32 0.0, %v680
      %v682 = vpop.f32.mrb[0].mxu0
      %683 = vmatprep.mubr.f32.mxu0 0.0
      %684 = vmatmul.mubr.f32.gmra.mrb[0].mxu0 %v478
      %v685 = vpop.f32.mrb[0].mxu0
      %v686 = vadd.f32 0.0, %v685
      %v687 = vpop.f32.mrb[0].mxu0
      %688 = vmatprep.mubr.f32.mxu0 0.0
      %689 = vmatmul.mubr.f32.gmra.mrb[0].mxu0 %v481
      %v690 = vpop.f32.mrb[0].mxu0
      %v691 = vadd.f32 0.0, %v690
      %v692 = vpop.f32.mrb[0].mxu0
      %693 = vmatprep.mubr.f32.mxu0 0.0
      %694 = vmatmul.mubr.f32.gmra.mrb[0].mxu0 %v484
      %v695 = vpop.f32.mrb[0].mxu0
      %v696 = vadd.f32 0.0, %v695
      %v697 = vpop.f32.mrb[0].mxu0
      %698 = vmatprep.mubr.f32.mxu0 0.0
      %699 = vmatmul.mubr.f32.gmra.mrb[0].mxu0 %v487
      %v700 = vpop.f32.mrb[0].mxu0
      %v701 = vadd.f32 0.0, %v700
      %v702 = vpop.f32.mrb[0].mxu0
      %703 = vmatprep.mubr.f32.mxu0 0.0
      %704 = vmatmul.mubr.f32.gmra.mrb[0].mxu0 %v490
      %v705 = vpop.f32.mrb[0].mxu0
      %v706 = vadd.f32 0.0, %v705
      %v707 = vpop.f32.mrb[0].mxu0
      %708 = vmatprep.mubr.f32.mxu0 0.0
      %709 = vmatmul.mubr.f32.gmra.mrb[0].mxu0 %v493
      %v710 = vpop.f32.mrb[0].mxu0
      %v711 = vadd.f32 0.0, %v710
      %v712 = vpop.f32.mrb[0].mxu0
      %713 = vdwg.mxu0
      %v715 = vrot.slane %v711, 7
      %v746 = vrot.slane %v566, 7
      %v747 = vrot.slane %v571, 7
      %v748 = vsel %vm495, %v746, %v747
      %v749 = vrot.slane %v576, 7
      %v750 = vsel %vm495, %v747, %v749
      %v751 = vrot.slane %v581, 7
      %v752 = vsel %vm495, %v749, %v751
      %v753 = vrot.slane %v586, 7
      %v754 = vsel %vm495, %v751, %v753
      %v755 = vrot.slane %v591, 7
      %v756 = vsel %vm495, %v753, %v755
      %v757 = vrot.slane %v596, 7
      %v758 = vsel %vm495, %v755, %v757
      %v759 = vrot.slane %v601, 7
      %v760 = vsel %vm495, %v757, %v759
      %v761 = vrot.slane %v606, 7
      %v762 = vsel %vm495, %v759, %v761
      %v763 = vrot.slane %v611, 7
      %v764 = vsel %vm495, %v761, %v763
      %v765 = vrot.slane %v616, 7
      %v766 = vsel %vm495, %v763, %v765
      %v767 = vrot.slane %v621, 7
      %v768 = vsel %vm495, %v765, %v767
      %v769 = vrot.slane %v626, 7
      %v770 = vsel %vm495, %v767, %v769
      %v771 = vrot.slane %v631, 7
      %v772 = vsel %vm495, %v769, %v771
      %v773 = vrot.slane %v636, 7
      %v774 = vsel %vm495, %v771, %v773
      %v775 = vrot.slane %v641, 7
      %v776 = vsel %vm495, %v773, %v775
      %v777 = vrot.slane %v646, 7
      %v778 = vsel %vm495, %v775, %v777
      %v779 = vrot.slane %v651, 7
      %v780 = vsel %vm495, %v777, %v779
      %v781 = vrot.slane %v656, 7
      %v782 = vsel %vm495, %v779, %v781
      %v783 = vrot.slane %v661, 7
      %v784 = vsel %vm495, %v781, %v783
      %v785 = vrot.slane %v666, 7
      %v786 = vsel %vm495, %v783, %v785
      %v787 = vrot.slane %v671, 7
      %v788 = vsel %vm495, %v785, %v787
      %v789 = vrot.slane %v676, 7
      %v790 = vsel %vm495, %v787, %v789
      %v791 = vrot.slane %v681, 7
      %v792 = vsel %vm495, %v789, %v791
      %v793 = vrot.slane %v686, 7
      %v794 = vsel %vm495, %v791, %v793
      %v795 = vrot.slane %v691, 7
      %v796 = vsel %vm495, %v793, %v795
      %v797 = vrot.slane %v696, 7
      %v798 = vsel %vm495, %v795, %v797
      %v799 = vrot.slane %v701, 7
      %v800 = vsel %vm495, %v797, %v799
      %v801 = vrot.slane %v706, 7
      %v802 = vsel %vm495, %v799, %v801
      %v803 = vsel %vm495, %v801, %v715
      %v834 = vsel %vm495, %v715, %v746
      %vm835 = vcmask 1046528
      %v836 = vrot.slane %v566, 1
      %v837 = vrot.slane %v571, 1
      %v838 = vsel %vm835, %v836, %v837
      %v839 = vrot.slane %v576, 1
      %v840 = vsel %vm835, %v837, %v839
      %v841 = vrot.slane %v581, 1
      %v842 = vsel %vm835, %v839, %v841
      %v843 = vrot.slane %v586, 1
      %v844 = vsel %vm835, %v841, %v843
      %v845 = vrot.slane %v591, 1
      %v846 = vsel %vm835, %v843, %v845
      %v847 = vrot.slane %v596, 1
      %v848 = vsel %vm835, %v845, %v847
      %v849 = vrot.slane %v601, 1
      %v850 = vsel %vm835, %v847, %v849
      %v851 = vrot.slane %v606, 1
      %v852 = vsel %vm835, %v849, %v851
      %v853 = vrot.slane %v611, 1
      %v854 = vsel %vm835, %v851, %v853
      %v855 = vrot.slane %v616, 1
      %v856 = vsel %vm835, %v853, %v855
      %v857 = vrot.slane %v621, 1
      %v858 = vsel %vm835, %v855, %v857
      %v859 = vrot.slane %v626, 1
      %v860 = vsel %vm835, %v857, %v859
      %v861 = vrot.slane %v631, 1
      %v862 = vsel %vm835, %v859, %v861
      %v863 = vrot.slane %v636, 1
      %v864 = vsel %vm835, %v861, %v863
      %v865 = vrot.slane %v641, 1
      %v866 = vsel %vm835, %v863, %v865
      %v867 = vrot.slane %v646, 1
      %v868 = vsel %vm835, %v865, %v867
      %v869 = vrot.slane %v651, 1
      %v870 = vsel %vm835, %v867, %v869
      %v871 = vrot.slane %v656, 1
      %v872 = vsel %vm835, %v869, %v871
      %v873 = vrot.slane %v661, 1
      %v874 = vsel %vm835, %v871, %v873
      %v875 = vrot.slane %v666, 1
      %v876 = vsel %vm835, %v873, %v875
      %v877 = vrot.slane %v671, 1
      %v878 = vsel %vm835, %v875, %v877
      %v879 = vrot.slane %v676, 1
      %v880 = vsel %vm835, %v877, %v879
      %v881 = vrot.slane %v681, 1
      %v882 = vsel %vm835, %v879, %v881
      %v883 = vrot.slane %v686, 1
      %v884 = vsel %vm835, %v881, %v883
      %v885 = vrot.slane %v691, 1
      %v886 = vsel %vm835, %v883, %v885
      %v887 = vrot.slane %v696, 1
      %v888 = vsel %vm835, %v885, %v887
      %v889 = vrot.slane %v701, 1
      %v890 = vsel %vm835, %v887, %v889
      %v891 = vrot.slane %v706, 1
      %v892 = vsel %vm835, %v889, %v891
      %v893 = vrot.slane %v711, 1
      %v894 = vsel %vm835, %v891, %v893
      %v926 = vsel %vm835, %v893, %v836
      %v927 = vld [vmem:[%s3] sm:$0xff]
      %v928 = vld [vmem:[%s3 + $0x8] sm:$0x1]
      %v929 = vlaneseq
      %v930 = vshrl.u32 %v929, 7
      %v931 = vsub.s32 4, %v930
      %v932 = vrot.slane %v927, %v931
      %v933 = vmul.f32 %v581, %v932
      %v934 = vmul.f32 %v586, %v932
      %v935 = vmul.f32 %v591, %v932
      %v936 = vmul.f32 %v596, %v932
      %v937 = vmul.f32 %v601, %v932
      %v938 = vmul.f32 %v606, %v932
      %v939 = vmul.f32 %v611, %v932
      %v940 = vmul.f32 %v616, %v932
      %v941 = vmul.f32 %v621, %v932
      %v942 = vmul.f32 %v626, %v932
      %v943 = vmul.f32 %v631, %v932
      %v944 = vmul.f32 %v636, %v932
      %v945 = vmul.f32 %v641, %v932
      %v946 = vmul.f32 %v646, %v932
      %v947 = vmul.f32 %v651, %v932
      %v948 = vmul.f32 %v656, %v932
      %v949 = vmul.f32 %v661, %v932
      %v950 = vmul.f32 %v666, %v932
      %v951 = vmul.f32 %v671, %v932
      %v952 = vmul.f32 %v676, %v932
      %v953 = vmul.f32 %v681, %v932
      %v954 = vmul.f32 %v686, %v932
      %v955 = vmul.f32 %v691, %v932
      %v956 = vmul.f32 %v696, %v932
      %v957 = vld [vmem:[%s5] sm:$0x1]
      %v959 = vlaneseq
      %v960 = vshrl.u32 %v959, 7
      %v961 = vsub.s32 0, %v960
      %v962 = vrot.slane %v957, %v961
      %v964 = vadd.f32 %v933, %v962
      %v965 = vadd.f32 %v934, %v962
      %v966 = vadd.f32 %v935, %v962
      %v967 = vadd.f32 %v936, %v962
      %v968 = vadd.f32 %v937, %v962
      %v969 = vadd.f32 %v938, %v962
      %v970 = vadd.f32 %v939, %v962
      %v971 = vadd.f32 %v940, %v962
      %v972 = vadd.f32 %v941, %v962
      %v973 = vadd.f32 %v942, %v962
      %v974 = vadd.f32 %v943, %v962
      %v975 = vadd.f32 %v944, %v962
      %v976 = vadd.f32 %v945, %v962
      %v977 = vadd.f32 %v946, %v962
      %v978 = vadd.f32 %v947, %v962
      %v979 = vadd.f32 %v948, %v962
      %v980 = vadd.f32 %v949, %v962
      %v981 = vadd.f32 %v950, %v962
      %v982 = vadd.f32 %v951, %v962
      %v983 = vadd.f32 %v952, %v962
      %v984 = vadd.f32 %v953, %v962
      %v985 = vadd.f32 %v954, %v962
      %v986 = vadd.f32 %v955, %v962
      %v987 = vadd.f32 %v956, %v962
      %v988 = vlaneseq
      %v989 = vshrl.u32 %v988, 7
      %v990 = vsub.s32 0, %v989
      %v991 = vrot.slane %v927, %v990
      %v992 = vmul.f32 %v834, %v991
      %v993 = vmul.f32 %v748, %v991
      %v994 = vmul.f32 %v750, %v991
      %v995 = vmul.f32 %v752, %v991
      %v996 = vmul.f32 %v754, %v991
      %v997 = vmul.f32 %v756, %v991
      %v998 = vmul.f32 %v758, %v991
      %v999 = vmul.f32 %v760, %v991
      %v1000 = vmul.f32 %v762, %v991
      %v1001 = vmul.f32 %v764, %v991
      %v1002 = vmul.f32 %v766, %v991
      %v1003 = vmul.f32 %v768, %v991
      %v1004 = vmul.f32 %v770, %v991
      %v1005 = vmul.f32 %v772, %v991
      %v1006 = vmul.f32 %v774, %v991
      %v1007 = vmul.f32 %v776, %v991
      %v1008 = vmul.f32 %v778, %v991
      %v1009 = vmul.f32 %v780, %v991
      %v1010 = vmul.f32 %v782, %v991
      %v1011 = vmul.f32 %v784, %v991
      %v1012 = vmul.f32 %v786, %v991
      %v1013 = vmul.f32 %v788, %v991
      %v1014 = vmul.f32 %v790, %v991
      %v1015 = vmul.f32 %v792, %v991
      %v1016 = vadd.f32 %v964, %v992
      %v1017 = vadd.f32 %v965, %v993
      %v1018 = vadd.f32 %v966, %v994
      %v1019 = vadd.f32 %v967, %v995
      %v1020 = vadd.f32 %v968, %v996
      %v1021 = vadd.f32 %v969, %v997
      %v1022 = vadd.f32 %v970, %v998
      %v1023 = vadd.f32 %v971, %v999
      %v1024 = vadd.f32 %v972, %v1000
      %v1025 = vadd.f32 %v973, %v1001
      %v1026 = vadd.f32 %v974, %v1002
      %v1027 = vadd.f32 %v975, %v1003
      %v1028 = vadd.f32 %v976, %v1004
      %v1029 = vadd.f32 %v977, %v1005
      %v1030 = vadd.f32 %v978, %v1006
      %v1031 = vadd.f32 %v979, %v1007
      %v1032 = vadd.f32 %v980, %v1008
      %v1033 = vadd.f32 %v981, %v1009
      %v1034 = vadd.f32 %v982, %v1010
      %v1035 = vadd.f32 %v983, %v1011
      %v1036 = vadd.f32 %v984, %v1012
      %v1037 = vadd.f32 %v985, %v1013
      %v1038 = vadd.f32 %v986, %v1014
      %v1039 = vadd.f32 %v987, %v1015
      %v1040 = vlaneseq
      %v1041 = vshrl.u32 %v1040, 7
      %v1042 = vsub.s32 1, %v1041
      %v1043 = vrot.slane %v927, %v1042
      %v1044 = vmul.f32 %v566, %v1043
      %v1045 = vmul.f32 %v571, %v1043
      %v1046 = vmul.f32 %v576, %v1043
      %v1047 = vmul.f32 %v581, %v1043
      %v1048 = vmul.f32 %v586, %v1043
      %v1049 = vmul.f32 %v591, %v1043
      %v1050 = vmul.f32 %v596, %v1043
      %v1051 = vmul.f32 %v601, %v1043
      %v1052 = vmul.f32 %v606, %v1043
      %v1053 = vmul.f32 %v611, %v1043
      %v1054 = vmul.f32 %v616, %v1043
      %v1055 = vmul.f32 %v621, %v1043
      %v1056 = vmul.f32 %v626, %v1043
      %v1057 = vmul.f32 %v631, %v1043
      %v1058 = vmul.f32 %v636, %v1043
      %v1059 = vmul.f32 %v641, %v1043
      %v1060 = vmul.f32 %v646, %v1043
      %v1061 = vmul.f32 %v651, %v1043
      %v1062 = vmul.f32 %v656, %v1043
      %v1063 = vmul.f32 %v661, %v1043
      %v1064 = vmul.f32 %v666, %v1043
      %v1065 = vmul.f32 %v671, %v1043
      %v1066 = vmul.f32 %v676, %v1043
      %v1067 = vmul.f32 %v681, %v1043
      %v1068 = vadd.f32 %v1016, %v1044
      %v1069 = vadd.f32 %v1017, %v1045
      %v1070 = vadd.f32 %v1018, %v1046
      %v1071 = vadd.f32 %v1019, %v1047
      %v1072 = vadd.f32 %v1020, %v1048
      %v1073 = vadd.f32 %v1021, %v1049
      %v1074 = vadd.f32 %v1022, %v1050
      %v1075 = vadd.f32 %v1023, %v1051
      %v1076 = vadd.f32 %v1024, %v1052
      %v1077 = vadd.f32 %v1025, %v1053
      %v1078 = vadd.f32 %v1026, %v1054
      %v1079 = vadd.f32 %v1027, %v1055
      %v1080 = vadd.f32 %v1028, %v1056
      %v1081 = vadd.f32 %v1029, %v1057
      %v1082 = vadd.f32 %v1030, %v1058
      %v1083 = vadd.f32 %v1031, %v1059
      %v1084 = vadd.f32 %v1032, %v1060
      %v1085 = vadd.f32 %v1033, %v1061
      %v1086 = vadd.f32 %v1034, %v1062
      %v1087 = vadd.f32 %v1035, %v1063
      %v1088 = vadd.f32 %v1036, %v1064
      %v1089 = vadd.f32 %v1037, %v1065
      %v1090 = vadd.f32 %v1038, %v1066
      %v1091 = vadd.f32 %v1039, %v1067
      %v1092 = vlaneseq
      %v1093 = vshrl.u32 %v1092, 7
      %v1094 = vsub.s32 2, %v1093
      %v1095 = vrot.slane %v927, %v1094
      %v1096 = vmul.f32 %v838, %v1095
      %v1097 = vmul.f32 %v840, %v1095
      %v1098 = vmul.f32 %v842, %v1095
      %v1099 = vmul.f32 %v844, %v1095
      %v1100 = vmul.f32 %v846, %v1095
      %v1101 = vmul.f32 %v848, %v1095
      %v1102 = vmul.f32 %v850, %v1095
      %v1103 = vmul.f32 %v852, %v1095
      %v1104 = vmul.f32 %v854, %v1095
      %v1105 = vmul.f32 %v856, %v1095
      %v1106 = vmul.f32 %v858, %v1095
      %v1107 = vmul.f32 %v860, %v1095
      %v1108 = vmul.f32 %v862, %v1095
      %v1109 = vmul.f32 %v864, %v1095
      %v1110 = vmul.f32 %v866, %v1095
      %v1111 = vmul.f32 %v868, %v1095
      %v1112 = vmul.f32 %v870, %v1095
      %v1113 = vmul.f32 %v872, %v1095
      %v1114 = vmul.f32 %v874, %v1095
      %v1115 = vmul.f32 %v876, %v1095
      %v1116 = vmul.f32 %v878, %v1095
      %v1117 = vmul.f32 %v880, %v1095
      %v1118 = vmul.f32 %v882, %v1095
      %v1119 = vmul.f32 %v884, %v1095
      %v1120 = vadd.f32 %v1068, %v1096
      %v1121 = vadd.f32 %v1069, %v1097
      %v1122 = vadd.f32 %v1070, %v1098
      %v1123 = vadd.f32 %v1071, %v1099
      %v1124 = vadd.f32 %v1072, %v1100
      %v1125 = vadd.f32 %v1073, %v1101
      %v1126 = vadd.f32 %v1074, %v1102
      %v1127 = vadd.f32 %v1075, %v1103
      %v1128 = vadd.f32 %v1076, %v1104
      %v1129 = vadd.f32 %v1077, %v1105
      %v1130 = vadd.f32 %v1078, %v1106
      %v1131 = vadd.f32 %v1079, %v1107
      %v1132 = vadd.f32 %v1080, %v1108
      %v1133 = vadd.f32 %v1081, %v1109
      %v1134 = vadd.f32 %v1082, %v1110
      %v1135 = vadd.f32 %v1083, %v1111
      %v1136 = vadd.f32 %v1084, %v1112
      %v1137 = vadd.f32 %v1085, %v1113
      %v1138 = vadd.f32 %v1086, %v1114
      %v1139 = vadd.f32 %v1087, %v1115
      %v1140 = vadd.f32 %v1088, %v1116
      %v1141 = vadd.f32 %v1089, %v1117
      %v1142 = vadd.f32 %v1090, %v1118
      %v1143 = vadd.f32 %v1091, %v1119
      %v1144 = vlaneseq
      %v1145 = vshrl.u32 %v1144, 7
      %v1146 = vsub.s32 3, %v1145
      %v1147 = vrot.slane %v927, %v1146
      %v1148 = vmul.f32 %v752, %v1147
      %v1149 = vmul.f32 %v754, %v1147
      %v1150 = vmul.f32 %v756, %v1147
      %v1151 = vmul.f32 %v758, %v1147
      %v1152 = vmul.f32 %v760, %v1147
      %v1153 = vmul.f32 %v762, %v1147
      %v1154 = vmul.f32 %v764, %v1147
      %v1155 = vmul.f32 %v766, %v1147
      %v1156 = vmul.f32 %v768, %v1147
      %v1157 = vmul.f32 %v770, %v1147
      %v1158 = vmul.f32 %v772, %v1147
      %v1159 = vmul.f32 %v774, %v1147
      %v1160 = vmul.f32 %v776, %v1147
      %v1161 = vmul.f32 %v778, %v1147
      %v1162 = vmul.f32 %v780, %v1147
      %v1163 = vmul.f32 %v782, %v1147
      %v1164 = vmul.f32 %v784, %v1147
      %v1165 = vmul.f32 %v786, %v1147
      %v1166 = vmul.f32 %v788, %v1147
      %v1167 = vmul.f32 %v790, %v1147
      %v1168 = vmul.f32 %v792, %v1147
      %v1169 = vmul.f32 %v794, %v1147
      %v1170 = vmul.f32 %v796, %v1147
      %v1171 = vmul.f32 %v798, %v1147
      %v1172 = vadd.f32 %v1120, %v1148
      %v1173 = vadd.f32 %v1121, %v1149
      %v1174 = vadd.f32 %v1122, %v1150
      %v1175 = vadd.f32 %v1123, %v1151
      %v1176 = vadd.f32 %v1124, %v1152
      %v1177 = vadd.f32 %v1125, %v1153
      %v1178 = vadd.f32 %v1126, %v1154
      %v1179 = vadd.f32 %v1127, %v1155
      %v1180 = vadd.f32 %v1128, %v1156
      %v1181 = vadd.f32 %v1129, %v1157
      %v1182 = vadd.f32 %v1130, %v1158
      %v1183 = vadd.f32 %v1131, %v1159
      %v1184 = vadd.f32 %v1132, %v1160
      %v1185 = vadd.f32 %v1133, %v1161
      %v1186 = vadd.f32 %v1134, %v1162
      %v1187 = vadd.f32 %v1135, %v1163
      %v1188 = vadd.f32 %v1136, %v1164
      %v1189 = vadd.f32 %v1137, %v1165
      %v1190 = vadd.f32 %v1138, %v1166
      %v1191 = vadd.f32 %v1139, %v1167
      %v1192 = vadd.f32 %v1140, %v1168
      %v1193 = vadd.f32 %v1141, %v1169
      %v1194 = vadd.f32 %v1142, %v1170
      %v1195 = vadd.f32 %v1143, %v1171
      %v1196 = vlaneseq
      %v1197 = vshrl.u32 %v1196, 7
      %v1198 = vsub.s32 5, %v1197
      %v1199 = vrot.slane %v927, %v1198
      %v1200 = vmul.f32 %v844, %v1199
      %v1201 = vmul.f32 %v846, %v1199
      %v1202 = vmul.f32 %v848, %v1199
      %v1203 = vmul.f32 %v850, %v1199
      %v1204 = vmul.f32 %v852, %v1199
      %v1205 = vmul.f32 %v854, %v1199
      %v1206 = vmul.f32 %v856, %v1199
      %v1207 = vmul.f32 %v858, %v1199
      %v1208 = vmul.f32 %v860, %v1199
      %v1209 = vmul.f32 %v862, %v1199
      %v1210 = vmul.f32 %v864, %v1199
      %v1211 = vmul.f32 %v866, %v1199
      %v1212 = vmul.f32 %v868, %v1199
      %v1213 = vmul.f32 %v870, %v1199
      %v1214 = vmul.f32 %v872, %v1199
      %v1215 = vmul.f32 %v874, %v1199
      %v1216 = vmul.f32 %v876, %v1199
      %v1217 = vmul.f32 %v878, %v1199
      %v1218 = vmul.f32 %v880, %v1199
      %v1219 = vmul.f32 %v882, %v1199
      %v1220 = vmul.f32 %v884, %v1199
      %v1221 = vmul.f32 %v886, %v1199
      %v1222 = vmul.f32 %v888, %v1199
      %v1223 = vmul.f32 %v890, %v1199
      %v1224 = vadd.f32 %v1172, %v1200
      %v1225 = vadd.f32 %v1173, %v1201
      %v1226 = vadd.f32 %v1174, %v1202
      %v1227 = vadd.f32 %v1175, %v1203
      %v1228 = vadd.f32 %v1176, %v1204
      %v1229 = vadd.f32 %v1177, %v1205
      %v1230 = vadd.f32 %v1178, %v1206
      %v1231 = vadd.f32 %v1179, %v1207
      %v1232 = vadd.f32 %v1180, %v1208
      %v1233 = vadd.f32 %v1181, %v1209
      %v1234 = vadd.f32 %v1182, %v1210
      %v1235 = vadd.f32 %v1183, %v1211
      %v1236 = vadd.f32 %v1184, %v1212
      %v1237 = vadd.f32 %v1185, %v1213
      %v1238 = vadd.f32 %v1186, %v1214
      %v1239 = vadd.f32 %v1187, %v1215
      %v1240 = vadd.f32 %v1188, %v1216
      %v1241 = vadd.f32 %v1189, %v1217
      %v1242 = vadd.f32 %v1190, %v1218
      %v1243 = vadd.f32 %v1191, %v1219
      %v1244 = vadd.f32 %v1192, %v1220
      %v1245 = vadd.f32 %v1193, %v1221
      %v1246 = vadd.f32 %v1194, %v1222
      %v1247 = vadd.f32 %v1195, %v1223
      %v1248 = vlaneseq
      %v1249 = vshrl.u32 %v1248, 7
      %v1250 = vsub.s32 6, %v1249
      %v1251 = vrot.slane %v927, %v1250
      %v1252 = vmul.f32 %v758, %v1251
      %v1253 = vmul.f32 %v760, %v1251
      %v1254 = vmul.f32 %v762, %v1251
      %v1255 = vmul.f32 %v764, %v1251
      %v1256 = vmul.f32 %v766, %v1251
      %v1257 = vmul.f32 %v768, %v1251
      %v1258 = vmul.f32 %v770, %v1251
      %v1259 = vmul.f32 %v772, %v1251
      %v1260 = vmul.f32 %v774, %v1251
      %v1261 = vmul.f32 %v776, %v1251
      %v1262 = vmul.f32 %v778, %v1251
      %v1263 = vmul.f32 %v780, %v1251
      %v1264 = vmul.f32 %v782, %v1251
      %v1265 = vmul.f32 %v784, %v1251
      %v1266 = vmul.f32 %v786, %v1251
      %v1267 = vmul.f32 %v788, %v1251
      %v1268 = vmul.f32 %v790, %v1251
      %v1269 = vmul.f32 %v792, %v1251
      %v1270 = vmul.f32 %v794, %v1251
      %v1271 = vmul.f32 %v796, %v1251
      %v1272 = vmul.f32 %v798, %v1251
      %v1273 = vmul.f32 %v800, %v1251
      %v1274 = vmul.f32 %v802, %v1251
      %v1275 = vmul.f32 %v803, %v1251
      %v1276 = vadd.f32 %v1224, %v1252
      %v1277 = vadd.f32 %v1225, %v1253
      %v1278 = vadd.f32 %v1226, %v1254
      %v1279 = vadd.f32 %v1227, %v1255
      %v1280 = vadd.f32 %v1228, %v1256
      %v1281 = vadd.f32 %v1229, %v1257
      %v1282 = vadd.f32 %v1230, %v1258
      %v1283 = vadd.f32 %v1231, %v1259
      %v1284 = vadd.f32 %v1232, %v1260
      %v1285 = vadd.f32 %v1233, %v1261
      %v1286 = vadd.f32 %v1234, %v1262
      %v1287 = vadd.f32 %v1235, %v1263
      %v1288 = vadd.f32 %v1236, %v1264
      %v1289 = vadd.f32 %v1237, %v1265
      %v1290 = vadd.f32 %v1238, %v1266
      %v1291 = vadd.f32 %v1239, %v1267
      %v1292 = vadd.f32 %v1240, %v1268
      %v1293 = vadd.f32 %v1241, %v1269
      %v1294 = vadd.f32 %v1242, %v1270
      %v1295 = vadd.f32 %v1243, %v1271
      %v1296 = vadd.f32 %v1244, %v1272
      %v1297 = vadd.f32 %v1245, %v1273
      %v1298 = vadd.f32 %v1246, %v1274
      %v1299 = vadd.f32 %v1247, %v1275
      %v1300 = vlaneseq
      %v1301 = vshrl.u32 %v1300, 7
      %v1302 = vsub.s32 7, %v1301
      %v1303 = vrot.slane %v927, %v1302
      %v1304 = vmul.f32 %v596, %v1303
      %v1305 = vmul.f32 %v601, %v1303
      %v1306 = vmul.f32 %v606, %v1303
      %v1307 = vmul.f32 %v611, %v1303
      %v1308 = vmul.f32 %v616, %v1303
      %v1309 = vmul.f32 %v621, %v1303
      %v1310 = vmul.f32 %v626, %v1303
      %v1311 = vmul.f32 %v631, %v1303
      %v1312 = vmul.f32 %v636, %v1303
      %v1313 = vmul.f32 %v641, %v1303
      %v1314 = vmul.f32 %v646, %v1303
      %v1315 = vmul.f32 %v651, %v1303
      %v1316 = vmul.f32 %v656, %v1303
      %v1317 = vmul.f32 %v661, %v1303
      %v1318 = vmul.f32 %v666, %v1303
      %v1319 = vmul.f32 %v671, %v1303
      %v1320 = vmul.f32 %v676, %v1303
      %v1321 = vmul.f32 %v681, %v1303
      %v1322 = vmul.f32 %v686, %v1303
      %v1323 = vmul.f32 %v691, %v1303
      %v1324 = vmul.f32 %v696, %v1303
      %v1325 = vmul.f32 %v701, %v1303
      %v1326 = vmul.f32 %v706, %v1303
      %v1327 = vmul.f32 %v711, %v1303
      %v1328 = vadd.f32 %v1276, %v1304
      %v1329 = vadd.f32 %v1277, %v1305
      %v1330 = vadd.f32 %v1278, %v1306
      %v1331 = vadd.f32 %v1279, %v1307
      %v1332 = vadd.f32 %v1280, %v1308
      %v1333 = vadd.f32 %v1281, %v1309
      %v1334 = vadd.f32 %v1282, %v1310
      %v1335 = vadd.f32 %v1283, %v1311
      %v1336 = vadd.f32 %v1284, %v1312
      %v1337 = vadd.f32 %v1285, %v1313
      %v1338 = vadd.f32 %v1286, %v1314
      %v1339 = vadd.f32 %v1287, %v1315
      %v1340 = vadd.f32 %v1288, %v1316
      %v1341 = vadd.f32 %v1289, %v1317
      %v1342 = vadd.f32 %v1290, %v1318
      %v1343 = vadd.f32 %v1291, %v1319
      %v1344 = vadd.f32 %v1292, %v1320
      %v1345 = vadd.f32 %v1293, %v1321
      %v1346 = vadd.f32 %v1294, %v1322
      %v1347 = vadd.f32 %v1295, %v1323
      %v1348 = vadd.f32 %v1296, %v1324
      %v1349 = vadd.f32 %v1297, %v1325
      %v1350 = vadd.f32 %v1298, %v1326
      %v1351 = vadd.f32 %v1299, %v1327
      %v1352 = vlaneseq
      %v1353 = vshrl.u32 %v1352, 7
      %v1354 = vsub.s32 0, %v1353
      %v1355 = vrot.slane %v928, %v1354
      %v1356 = vmul.f32 %v850, %v1355
      %v1357 = vmul.f32 %v852, %v1355
      %v1358 = vmul.f32 %v854, %v1355
      %v1359 = vmul.f32 %v856, %v1355
      %v1360 = vmul.f32 %v858, %v1355
      %v1361 = vmul.f32 %v860, %v1355
      %v1362 = vmul.f32 %v862, %v1355
      %v1363 = vmul.f32 %v864, %v1355
      %v1364 = vmul.f32 %v866, %v1355
      %v1365 = vmul.f32 %v868, %v1355
      %v1366 = vmul.f32 %v870, %v1355
      %v1367 = vmul.f32 %v872, %v1355
      %v1368 = vmul.f32 %v874, %v1355
      %v1369 = vmul.f32 %v876, %v1355
      %v1370 = vmul.f32 %v878, %v1355
      %v1371 = vmul.f32 %v880, %v1355
      %v1372 = vmul.f32 %v882, %v1355
      %v1373 = vmul.f32 %v884, %v1355
      %v1374 = vmul.f32 %v886, %v1355
      %v1375 = vmul.f32 %v888, %v1355
      %v1376 = vmul.f32 %v890, %v1355
      %v1377 = vmul.f32 %v892, %v1355
      %v1378 = vmul.f32 %v894, %v1355
      %v1379 = vmul.f32 %v926, %v1355
      %v1380 = vadd.f32 %v1328, %v1356
      %v1381 = vadd.f32 %v1329, %v1357
      %v1382 = vadd.f32 %v1330, %v1358
      %v1383 = vadd.f32 %v1331, %v1359
      %v1384 = vadd.f32 %v1332, %v1360
      %v1385 = vadd.f32 %v1333, %v1361
      %v1386 = vadd.f32 %v1334, %v1362
      %v1387 = vadd.f32 %v1335, %v1363
      %v1388 = vadd.f32 %v1336, %v1364
      %v1389 = vadd.f32 %v1337, %v1365
      %v1390 = vadd.f32 %v1338, %v1366
      %v1391 = vadd.f32 %v1339, %v1367
      %v1392 = vadd.f32 %v1340, %v1368
      %v1393 = vadd.f32 %v1341, %v1369
      %v1394 = vadd.f32 %v1342, %v1370
      %v1395 = vadd.f32 %v1343, %v1371
      %v1396 = vadd.f32 %v1344, %v1372
      %v1397 = vadd.f32 %v1345, %v1373
      %v1398 = vadd.f32 %v1346, %v1374
      %v1399 = vadd.f32 %v1347, %v1375
      %v1400 = vadd.f32 %v1348, %v1376
      %v1401 = vadd.f32 %v1349, %v1377
      %v1402 = vadd.f32 %v1350, %v1378
      %v1403 = vadd.f32 %v1351, %v1379
      %v1404 = vld [vmem:[%s2] sm:$0xff]
      %v1405 = vld [vmem:[%s2 + $0x8] sm:$0x1]
      %v1407 = vsel %vm495, %v1405, 0
      %1409 = vmatprep.subr.mxu0 0.0
      %1410 = vmatpush1.msra.mxu0 %v1404
      %1411 = vmatprep.subr.mxu0 0.0
      %1412 = vmatpush1.msra.mxu0 %v1407
      %1413 = vmatprep.subr.mxu0 0.0
      %1414 = vmatpush1.msra.mxu0 0.0
      %1415 = vmatprep.subr.mxu0 0.0
      %1416 = vmatpush1.msra.mxu0 0.0
      %1417 = vmatprep.subr.mxu0 0.0
      %1418 = vmatpush1.msra.mxu0 0.0
      %1419 = vmatprep.subr.mxu0 0.0
      %1420 = vmatpush1.msra.mxu0 0.0
      %1421 = vmatprep.subr.mxu0 0.0
      %1422 = vmatpush1.msra.mxu0 0.0
      %1423 = vmatprep.subr.mxu0 0.0
      %1424 = vmatpush1.msra.mxu0 0.0
      %1425 = vmatprep.subr.mxu0 0.0
      %1426 = vmatpush1.msra.mxu0 0.0
      %1427 = vmatprep.subr.mxu0 0.0
      %1428 = vmatpush1.msra.mxu0 0.0
      %1429 = vmatprep.subr.mxu0 0.0
      %1430 = vmatpush1.msra.mxu0 0.0
      %1431 = vmatprep.subr.mxu0 0.0
      %1432 = vmatpush1.msra.mxu0 0.0
      %1433 = vmatprep.subr.mxu0 0.0
      %1434 = vmatpush1.msra.mxu0 0.0
      %1435 = vmatprep.subr.mxu0 0.0
      %1436 = vmatpush1.msra.mxu0 0.0
      %1437 = vmatprep.subr.mxu0 0.0
      %1438 = vmatpush1.msra.mxu0 0.0
      %1439 = vmatprep.subr.mxu0 0.0
      %1440 = vmatpush1.msra.mxu0 0.0
      %1441 = vmatprep.subr.mxu0 0.0
      %1442 = vmatpush1.msra.mxu0 0.0
      %1443 = vmatprep.subr.mxu0 0.0
      %1444 = vmatpush1.msra.mxu0 0.0
      %1445 = vmatprep.subr.mxu0 0.0
      %1446 = vmatpush1.msra.mxu0 0.0
      %1447 = vmatprep.subr.mxu0 0.0
      %1448 = vmatpush1.msra.mxu0 0.0
      %1449 = vmatprep.subr.mxu0 0.0
      %1450 = vmatpush1.msra.mxu0 0.0
      %1451 = vmatprep.subr.mxu0 0.0
      %1452 = vmatpush1.msra.mxu0 0.0
      %1453 = vmatprep.subr.mxu0 0.0
      %1454 = vmatpush1.msra.mxu0 0.0
      %1455 = vmatprep.subr.mxu0 0.0
      %1456 = vmatpush1.msra.mxu0 0.0
      %1457 = vmatprep.subr.mxu0 0.0
      %1458 = vmatpush1.msra.mxu0 0.0
      %1459 = vmatprep.subr.mxu0 0.0
      %1460 = vmatpush1.msra.mxu0 0.0
      %1461 = vmatprep.subr.mxu0 0.0
      %1462 = vmatpush1.msra.mxu0 0.0
      %1463 = vmatprep.subr.mxu0 0.0
      %1464 = vmatpush1.msra.mxu0 0.0
      %1465 = vmatprep.subr.mxu0 0.0
      %1466 = vmatpush1.msra.mxu0 0.0
      %1467 = vmatprep.subr.mxu0 0.0
      %1468 = vmatpush1.msra.mxu0 0.0
      %1469 = vmatprep.subr.mxu0 0.0
      %1470 = vmatpush1.msra.mxu0 0.0
      %1471 = vmatprep.subr.mxu0 0.0
      %1472 = vmatpush1.msra.mxu0 0.0
      %1473 = vmatprep.mubr.f32.mxu0 0.0
      %1474 = vmatmul.mubr.f32.gmra.mrb[0].mxu0 %v406
      %v1475 = vpop.f32.mrb[0].mxu0
      %v1476 = vadd.f32 0.0, %v1475
      %v1477 = vpop.f32.mrb[0].mxu0
      %1478 = vmatprep.mubr.f32.mxu0 0.0
      %1479 = vmatmul.mubr.f32.gmra.mrb[0].mxu0 %v409
      %v1480 = vpop.f32.mrb[0].mxu0
      %v1481 = vadd.f32 0.0, %v1480
      %v1482 = vpop.f32.mrb[0].mxu0
      %1483 = vmatprep.mubr.f32.mxu0 0.0
      %1484 = vmatmul.mubr.f32.gmra.mrb[0].mxu0 %v412
      %v1485 = vpop.f32.mrb[0].mxu0
      %v1486 = vadd.f32 0.0, %v1485
      %v1487 = vpop.f32.mrb[0].mxu0
      %1488 = vmatprep.mubr.f32.mxu0 0.0
      %1489 = vmatmul.mubr.f32.gmra.mrb[0].mxu0 %v415
      %v1490 = vpop.f32.mrb[0].mxu0
      %v1491 = vadd.f32 0.0, %v1490
      %v1492 = vpop.f32.mrb[0].mxu0
      %1493 = vmatprep.mubr.f32.mxu0 0.0
      %1494 = vmatmul.mubr.f32.gmra.mrb[0].mxu0 %v418
      %v1495 = vpop.f32.mrb[0].mxu0
      %v1496 = vadd.f32 0.0, %v1495
      %v1497 = vpop.f32.mrb[0].mxu0
      %1498 = vmatprep.mubr.f32.mxu0 0.0
      %1499 = vmatmul.mubr.f32.gmra.mrb[0].mxu0 %v421
      %v1500 = vpop.f32.mrb[0].mxu0
      %v1501 = vadd.f32 0.0, %v1500
      %v1502 = vpop.f32.mrb[0].mxu0
      %1503 = vmatprep.mubr.f32.mxu0 0.0
      %1504 = vmatmul.mubr.f32.gmra.mrb[0].mxu0 %v424
      %v1505 = vpop.f32.mrb[0].mxu0
      %v1506 = vadd.f32 0.0, %v1505
      %v1507 = vpop.f32.mrb[0].mxu0
      %1508 = vmatprep.mubr.f32.mxu0 0.0
      %1509 = vmatmul.mubr.f32.gmra.mrb[0].mxu0 %v427
      %v1510 = vpop.f32.mrb[0].mxu0
      %v1511 = vadd.f32 0.0, %v1510
      %v1512 = vpop.f32.mrb[0].mxu0
      %1513 = vmatprep.mubr.f32.mxu0 0.0
      %1514 = vmatmul.mubr.f32.gmra.mrb[0].mxu0 %v430
      %v1515 = vpop.f32.mrb[0].mxu0
      %v1516 = vadd.f32 0.0, %v1515
      %v1517 = vpop.f32.mrb[0].mxu0
      %1518 = vmatprep.mubr.f32.mxu0 0.0
      %1519 = vmatmul.mubr.f32.gmra.mrb[0].mxu0 %v433
      %v1520 = vpop.f32.mrb[0].mxu0
      %v1521 = vadd.f32 0.0, %v1520
      %v1522 = vpop.f32.mrb[0].mxu0
      %1523 = vmatprep.mubr.f32.mxu0 0.0
      %1524 = vmatmul.mubr.f32.gmra.mrb[0].mxu0 %v436
      %v1525 = vpop.f32.mrb[0].mxu0
      %v1526 = vadd.f32 0.0, %v1525
      %v1527 = vpop.f32.mrb[0].mxu0
      %1528 = vmatprep.mubr.f32.mxu0 0.0
      %1529 = vmatmul.mubr.f32.gmra.mrb[0].mxu0 %v439
      %v1530 = vpop.f32.mrb[0].mxu0
      %v1531 = vadd.f32 0.0, %v1530
      %v1532 = vpop.f32.mrb[0].mxu0
      %1533 = vmatprep.mubr.f32.mxu0 0.0
      %1534 = vmatmul.mubr.f32.gmra.mrb[0].mxu0 %v442
      %v1535 = vpop.f32.mrb[0].mxu0
      %v1536 = vadd.f32 0.0, %v1535
      %v1537 = vpop.f32.mrb[0].mxu0
      %1538 = vmatprep.mubr.f32.mxu0 0.0
      %1539 = vmatmul.mubr.f32.gmra.mrb[0].mxu0 %v445
      %v1540 = vpop.f32.mrb[0].mxu0
      %v1541 = vadd.f32 0.0, %v1540
      %v1542 = vpop.f32.mrb[0].mxu0
      %1543 = vmatprep.mubr.f32.mxu0 0.0
      %1544 = vmatmul.mubr.f32.gmra.mrb[0].mxu0 %v448
      %v1545 = vpop.f32.mrb[0].mxu0
      %v1546 = vadd.f32 0.0, %v1545
      %v1547 = vpop.f32.mrb[0].mxu0
      %1548 = vmatprep.mubr.f32.mxu0 0.0
      %1549 = vmatmul.mubr.f32.gmra.mrb[0].mxu0 %v451
      %v1550 = vpop.f32.mrb[0].mxu0
      %v1551 = vadd.f32 0.0, %v1550
      %v1552 = vpop.f32.mrb[0].mxu0
      %1553 = vmatprep.mubr.f32.mxu0 0.0
      %1554 = vmatmul.mubr.f32.gmra.mrb[0].mxu0 %v454
      %v1555 = vpop.f32.mrb[0].mxu0
      %v1556 = vadd.f32 0.0, %v1555
      %v1557 = vpop.f32.mrb[0].mxu0
      %1558 = vmatprep.mubr.f32.mxu0 0.0
      %1559 = vmatmul.mubr.f32.gmra.mrb[0].mxu0 %v457
      %v1560 = vpop.f32.mrb[0].mxu0
      %v1561 = vadd.f32 0.0, %v1560
      %v1562 = vpop.f32.mrb[0].mxu0
      %1563 = vmatprep.mubr.f32.mxu0 0.0
      %1564 = vmatmul.mubr.f32.gmra.mrb[0].mxu0 %v460
      %v1565 = vpop.f32.mrb[0].mxu0
      %v1566 = vadd.f32 0.0, %v1565
      %v1567 = vpop.f32.mrb[0].mxu0
      %1568 = vmatprep.mubr.f32.mxu0 0.0
      %1569 = vmatmul.mubr.f32.gmra.mrb[0].mxu0 %v463
      %v1570 = vpop.f32.mrb[0].mxu0
      %v1571 = vadd.f32 0.0, %v1570
      %v1572 = vpop.f32.mrb[0].mxu0
      %1573 = vmatprep.mubr.f32.mxu0 0.0
      %1574 = vmatmul.mubr.f32.gmra.mrb[0].mxu0 %v466
      %v1575 = vpop.f32.mrb[0].mxu0
      %v1576 = vadd.f32 0.0, %v1575
      %v1577 = vpop.f32.mrb[0].mxu0
      %1578 = vmatprep.mubr.f32.mxu0 0.0
      %1579 = vmatmul.mubr.f32.gmra.mrb[0].mxu0 %v469
      %v1580 = vpop.f32.mrb[0].mxu0
      %v1581 = vadd.f32 0.0, %v1580
      %v1582 = vpop.f32.mrb[0].mxu0
      %1583 = vmatprep.mubr.f32.mxu0 0.0
      %1584 = vmatmul.mubr.f32.gmra.mrb[0].mxu0 %v472
      %v1585 = vpop.f32.mrb[0].mxu0
      %v1586 = vadd.f32 0.0, %v1585
      %v1587 = vpop.f32.mrb[0].mxu0
      %1588 = vmatprep.mubr.f32.mxu0 0.0
      %1589 = vmatmul.mubr.f32.gmra.mrb[0].mxu0 %v475
      %v1590 = vpop.f32.mrb[0].mxu0
      %v1591 = vadd.f32 0.0, %v1590
      %v1592 = vpop.f32.mrb[0].mxu0
      %1593 = vmatprep.mubr.f32.mxu0 0.0
      %1594 = vmatmul.mubr.f32.gmra.mrb[0].mxu0 %v478
      %v1595 = vpop.f32.mrb[0].mxu0
      %v1596 = vadd.f32 0.0, %v1595
      %v1597 = vpop.f32.mrb[0].mxu0
      %1598 = vmatprep.mubr.f32.mxu0 0.0
      %1599 = vmatmul.mubr.f32.gmra.mrb[0].mxu0 %v481
      %v1600 = vpop.f32.mrb[0].mxu0
      %v1601 = vadd.f32 0.0, %v1600
      %v1602 = vpop.f32.mrb[0].mxu0
      %1603 = vmatprep.mubr.f32.mxu0 0.0
      %1604 = vmatmul.mubr.f32.gmra.mrb[0].mxu0 %v484
      %v1605 = vpop.f32.mrb[0].mxu0
      %v1606 = vadd.f32 0.0, %v1605
      %v1607 = vpop.f32.mrb[0].mxu0
      %1608 = vmatprep.mubr.f32.mxu0 0.0
      %1609 = vmatmul.mubr.f32.gmra.mrb[0].mxu0 %v487
      %v1610 = vpop.f32.mrb[0].mxu0
      %v1611 = vadd.f32 0.0, %v1610
      %v1612 = vpop.f32.mrb[0].mxu0
      %1613 = vmatprep.mubr.f32.mxu0 0.0
      %1614 = vmatmul.mubr.f32.gmra.mrb[0].mxu0 %v490
      %v1615 = vpop.f32.mrb[0].mxu0
      %v1616 = vadd.f32 0.0, %v1615
      %v1617 = vpop.f32.mrb[0].mxu0
      %1618 = vmatprep.mubr.f32.mxu0 0.0
      %1619 = vmatmul.mubr.f32.gmra.mrb[0].mxu0 %v493
      %v1620 = vpop.f32.mrb[0].mxu0
      %v1621 = vadd.f32 0.0, %v1620
      %v1622 = vpop.f32.mrb[0].mxu0
      %1623 = vdwg.mxu0
      %v1625 = vrot.slane %v1621, 7
      %v1656 = vrot.slane %v1476, 7
      %v1657 = vrot.slane %v1481, 7
      %v1658 = vsel %vm495, %v1656, %v1657
      %v1659 = vrot.slane %v1486, 7
      %v1660 = vsel %vm495, %v1657, %v1659
      %v1661 = vrot.slane %v1491, 7
      %v1662 = vsel %vm495, %v1659, %v1661
      %v1663 = vrot.slane %v1496, 7
      %v1664 = vsel %vm495, %v1661, %v1663
      %v1665 = vrot.slane %v1501, 7
      %v1666 = vsel %vm495, %v1663, %v1665
      %v1667 = vrot.slane %v1506, 7
      %v1668 = vsel %vm495, %v1665, %v1667
      %v1669 = vrot.slane %v1511, 7
      %v1670 = vsel %vm495, %v1667, %v1669
      %v1671 = vrot.slane %v1516, 7
      %v1672 = vsel %vm495, %v1669, %v1671
      %v1673 = vrot.slane %v1521, 7
      %v1674 = vsel %vm495, %v1671, %v1673
      %v1675 = vrot.slane %v1526, 7
      %v1676 = vsel %vm495, %v1673, %v1675
      %v1677 = vrot.slane %v1531, 7
      %v1678 = vsel %vm495, %v1675, %v1677
      %v1679 = vrot.slane %v1536, 7
      %v1680 = vsel %vm495, %v1677, %v1679
      %v1681 = vrot.slane %v1541, 7
      %v1682 = vsel %vm495, %v1679, %v1681
      %v1683 = vrot.slane %v1546, 7
      %v1684 = vsel %vm495, %v1681, %v1683
      %v1685 = vrot.slane %v1551, 7
      %v1686 = vsel %vm495, %v1683, %v1685
      %v1687 = vrot.slane %v1556, 7
      %v1688 = vsel %vm495, %v1685, %v1687
      %v1689 = vrot.slane %v1561, 7
      %v1690 = vsel %vm495, %v1687, %v1689
      %v1691 = vrot.slane %v1566, 7
      %v1692 = vsel %vm495, %v1689, %v1691
      %v1693 = vrot.slane %v1571, 7
      %v1694 = vsel %vm495, %v1691, %v1693
      %v1695 = vrot.slane %v1576, 7
      %v1696 = vsel %vm495, %v1693, %v1695
      %v1697 = vrot.slane %v1581, 7
      %v1698 = vsel %vm495, %v1695, %v1697
      %v1699 = vrot.slane %v1586, 7
      %v1700 = vsel %vm495, %v1697, %v1699
      %v1701 = vrot.slane %v1591, 7
      %v1702 = vsel %vm495, %v1699, %v1701
      %v1703 = vrot.slane %v1596, 7
      %v1704 = vsel %vm495, %v1701, %v1703
      %v1705 = vrot.slane %v1601, 7
      %v1706 = vsel %vm495, %v1703, %v1705
      %v1707 = vrot.slane %v1606, 7
      %v1708 = vsel %vm495, %v1705, %v1707
      %v1709 = vrot.slane %v1611, 7
      %v1710 = vsel %vm495, %v1707, %v1709
      %v1711 = vrot.slane %v1616, 7
      %v1712 = vsel %vm495, %v1709, %v1711
      %v1713 = vsel %vm495, %v1711, %v1625
      %v1744 = vsel %vm495, %v1625, %v1656
      %v1745 = vrot.slane %v1476, 1
      %v1746 = vrot.slane %v1481, 1
      %v1747 = vsel %vm835, %v1745, %v1746
      %v1748 = vrot.slane %v1486, 1
      %v1749 = vsel %vm835, %v1746, %v1748
      %v1750 = vrot.slane %v1491, 1
      %v1751 = vsel %vm835, %v1748, %v1750
      %v1752 = vrot.slane %v1496, 1
      %v1753 = vsel %vm835, %v1750, %v1752
      %v1754 = vrot.slane %v1501, 1
      %v1755 = vsel %vm835, %v1752, %v1754
      %v1756 = vrot.slane %v1506, 1
      %v1757 = vsel %vm835, %v1754, %v1756
      %v1758 = vrot.slane %v1511, 1
      %v1759 = vsel %vm835, %v1756, %v1758
      %v1760 = vrot.slane %v1516, 1
      %v1761 = vsel %vm835, %v1758, %v1760
      %v1762 = vrot.slane %v1521, 1
      %v1763 = vsel %vm835, %v1760, %v1762
      %v1764 = vrot.slane %v1526, 1
      %v1765 = vsel %vm835, %v1762, %v1764
      %v1766 = vrot.slane %v1531, 1
      %v1767 = vsel %vm835, %v1764, %v1766
      %v1768 = vrot.slane %v1536, 1
      %v1769 = vsel %vm835, %v1766, %v1768
      %v1770 = vrot.slane %v1541, 1
      %v1771 = vsel %vm835, %v1768, %v1770
      %v1772 = vrot.slane %v1546, 1
      %v1773 = vsel %vm835, %v1770, %v1772
      %v1774 = vrot.slane %v1551, 1
      %v1775 = vsel %vm835, %v1772, %v1774
      %v1776 = vrot.slane %v1556, 1
      %v1777 = vsel %vm835, %v1774, %v1776
      %v1778 = vrot.slane %v1561, 1
      %v1779 = vsel %vm835, %v1776, %v1778
      %v1780 = vrot.slane %v1566, 1
      %v1781 = vsel %vm835, %v1778, %v1780
      %v1782 = vrot.slane %v1571, 1
      %v1783 = vsel %vm835, %v1780, %v1782
      %v1784 = vrot.slane %v1576, 1
      %v1785 = vsel %vm835, %v1782, %v1784
      %v1786 = vrot.slane %v1581, 1
      %v1787 = vsel %vm835, %v1784, %v1786
      %v1788 = vrot.slane %v1586, 1
      %v1789 = vsel %vm835, %v1786, %v1788
      %v1790 = vrot.slane %v1591, 1
      %v1791 = vsel %vm835, %v1788, %v1790
      %v1792 = vrot.slane %v1596, 1
      %v1793 = vsel %vm835, %v1790, %v1792
      %v1794 = vrot.slane %v1601, 1
      %v1795 = vsel %vm835, %v1792, %v1794
      %v1796 = vrot.slane %v1606, 1
      %v1797 = vsel %vm835, %v1794, %v1796
      %v1798 = vrot.slane %v1611, 1
      %v1799 = vsel %vm835, %v1796, %v1798
      %v1800 = vrot.slane %v1616, 1
      %v1801 = vsel %vm835, %v1798, %v1800
      %v1802 = vrot.slane %v1621, 1
      %v1803 = vsel %vm835, %v1800, %v1802
      %v1835 = vsel %vm835, %v1802, %v1745
      %v1836 = vld [vmem:[%s4] sm:$0xff]
      %v1837 = vld [vmem:[%s4 + $0x8] sm:$0x1]
      %v1838 = vlaneseq
      %v1839 = vshrl.u32 %v1838, 7
      %v1840 = vsub.s32 4, %v1839
      %v1841 = vrot.slane %v1836, %v1840
      %v1842 = vmul.f32 %v1491, %v1841
      %v1843 = vmul.f32 %v1496, %v1841
      %v1844 = vmul.f32 %v1501, %v1841
      %v1845 = vmul.f32 %v1506, %v1841
      %v1846 = vmul.f32 %v1511, %v1841
      %v1847 = vmul.f32 %v1516, %v1841
      %v1848 = vmul.f32 %v1521, %v1841
      %v1849 = vmul.f32 %v1526, %v1841
      %v1850 = vmul.f32 %v1531, %v1841
      %v1851 = vmul.f32 %v1536, %v1841
      %v1852 = vmul.f32 %v1541, %v1841
      %v1853 = vmul.f32 %v1546, %v1841
      %v1854 = vmul.f32 %v1551, %v1841
      %v1855 = vmul.f32 %v1556, %v1841
      %v1856 = vmul.f32 %v1561, %v1841
      %v1857 = vmul.f32 %v1566, %v1841
      %v1858 = vmul.f32 %v1571, %v1841
      %v1859 = vmul.f32 %v1576, %v1841
      %v1860 = vmul.f32 %v1581, %v1841
      %v1861 = vmul.f32 %v1586, %v1841
      %v1862 = vmul.f32 %v1591, %v1841
      %v1863 = vmul.f32 %v1596, %v1841
      %v1864 = vmul.f32 %v1601, %v1841
      %v1865 = vmul.f32 %v1606, %v1841
      %v1866 = vld [vmem:[%s6] sm:$0x1]
      %v1868 = vlaneseq
      %v1869 = vshrl.u32 %v1868, 7
      %v1870 = vsub.s32 0, %v1869
      %v1871 = vrot.slane %v1866, %v1870
      %v1873 = vadd.f32 %v1842, %v1871
      %v1874 = vadd.f32 %v1843, %v1871
      %v1875 = vadd.f32 %v1844, %v1871
      %v1876 = vadd.f32 %v1845, %v1871
      %v1877 = vadd.f32 %v1846, %v1871
      %v1878 = vadd.f32 %v1847, %v1871
      %v1879 = vadd.f32 %v1848, %v1871
      %v1880 = vadd.f32 %v1849, %v1871
      %v1881 = vadd.f32 %v1850, %v1871
      %v1882 = vadd.f32 %v1851, %v1871
      %v1883 = vadd.f32 %v1852, %v1871
      %v1884 = vadd.f32 %v1853, %v1871
      %v1885 = vadd.f32 %v1854, %v1871
      %v1886 = vadd.f32 %v1855, %v1871
      %v1887 = vadd.f32 %v1856, %v1871
      %v1888 = vadd.f32 %v1857, %v1871
      %v1889 = vadd.f32 %v1858, %v1871
      %v1890 = vadd.f32 %v1859, %v1871
      %v1891 = vadd.f32 %v1860, %v1871
      %v1892 = vadd.f32 %v1861, %v1871
      %v1893 = vadd.f32 %v1862, %v1871
      %v1894 = vadd.f32 %v1863, %v1871
      %v1895 = vadd.f32 %v1864, %v1871
      %v1896 = vadd.f32 %v1865, %v1871
      %v1897 = vlaneseq
      %v1898 = vshrl.u32 %v1897, 7
      %v1899 = vsub.s32 0, %v1898
      %v1900 = vrot.slane %v1836, %v1899
      %v1901 = vmul.f32 %v1744, %v1900
      %v1902 = vmul.f32 %v1658, %v1900
      %v1903 = vmul.f32 %v1660, %v1900
      %v1904 = vmul.f32 %v1662, %v1900
      %v1905 = vmul.f32 %v1664, %v1900
      %v1906 = vmul.f32 %v1666, %v1900
      %v1907 = vmul.f32 %v1668, %v1900
      %v1908 = vmul.f32 %v1670, %v1900
      %v1909 = vmul.f32 %v1672, %v1900
      %v1910 = vmul.f32 %v1674, %v1900
      %v1911 = vmul.f32 %v1676, %v1900
      %v1912 = vmul.f32 %v1678, %v1900
      %v1913 = vmul.f32 %v1680, %v1900
      %v1914 = vmul.f32 %v1682, %v1900
      %v1915 = vmul.f32 %v1684, %v1900
      %v1916 = vmul.f32 %v1686, %v1900
      %v1917 = vmul.f32 %v1688, %v1900
      %v1918 = vmul.f32 %v1690, %v1900
      %v1919 = vmul.f32 %v1692, %v1900
      %v1920 = vmul.f32 %v1694, %v1900
      %v1921 = vmul.f32 %v1696, %v1900
      %v1922 = vmul.f32 %v1698, %v1900
      %v1923 = vmul.f32 %v1700, %v1900
      %v1924 = vmul.f32 %v1702, %v1900
      %v1925 = vadd.f32 %v1873, %v1901
      %v1926 = vadd.f32 %v1874, %v1902
      %v1927 = vadd.f32 %v1875, %v1903
      %v1928 = vadd.f32 %v1876, %v1904
      %v1929 = vadd.f32 %v1877, %v1905
      %v1930 = vadd.f32 %v1878, %v1906
      %v1931 = vadd.f32 %v1879, %v1907
      %v1932 = vadd.f32 %v1880, %v1908
      %v1933 = vadd.f32 %v1881, %v1909
      %v1934 = vadd.f32 %v1882, %v1910
      %v1935 = vadd.f32 %v1883, %v1911
      %v1936 = vadd.f32 %v1884, %v1912
      %v1937 = vadd.f32 %v1885, %v1913
      %v1938 = vadd.f32 %v1886, %v1914
      %v1939 = vadd.f32 %v1887, %v1915
      %v1940 = vadd.f32 %v1888, %v1916
      %v1941 = vadd.f32 %v1889, %v1917
      %v1942 = vadd.f32 %v1890, %v1918
      %v1943 = vadd.f32 %v1891, %v1919
      %v1944 = vadd.f32 %v1892, %v1920
      %v1945 = vadd.f32 %v1893, %v1921
      %v1946 = vadd.f32 %v1894, %v1922
      %v1947 = vadd.f32 %v1895, %v1923
      %v1948 = vadd.f32 %v1896, %v1924
      %v1949 = vlaneseq
      %v1950 = vshrl.u32 %v1949, 7
      %v1951 = vsub.s32 1, %v1950
      %v1952 = vrot.slane %v1836, %v1951
      %v1953 = vmul.f32 %v1476, %v1952
      %v1954 = vmul.f32 %v1481, %v1952
      %v1955 = vmul.f32 %v1486, %v1952
      %v1956 = vmul.f32 %v1491, %v1952
      %v1957 = vmul.f32 %v1496, %v1952
      %v1958 = vmul.f32 %v1501, %v1952
      %v1959 = vmul.f32 %v1506, %v1952
      %v1960 = vmul.f32 %v1511, %v1952
      %v1961 = vmul.f32 %v1516, %v1952
      %v1962 = vmul.f32 %v1521, %v1952
      %v1963 = vmul.f32 %v1526, %v1952
      %v1964 = vmul.f32 %v1531, %v1952
      %v1965 = vmul.f32 %v1536, %v1952
      %v1966 = vmul.f32 %v1541, %v1952
      %v1967 = vmul.f32 %v1546, %v1952
      %v1968 = vmul.f32 %v1551, %v1952
      %v1969 = vmul.f32 %v1556, %v1952
      %v1970 = vmul.f32 %v1561, %v1952
      %v1971 = vmul.f32 %v1566, %v1952
      %v1972 = vmul.f32 %v1571, %v1952
      %v1973 = vmul.f32 %v1576, %v1952
      %v1974 = vmul.f32 %v1581, %v1952
      %v1975 = vmul.f32 %v1586, %v1952
      %v1976 = vmul.f32 %v1591, %v1952
      %v1977 = vadd.f32 %v1925, %v1953
      %v1978 = vadd.f32 %v1926, %v1954
      %v1979 = vadd.f32 %v1927, %v1955
      %v1980 = vadd.f32 %v1928, %v1956
      %v1981 = vadd.f32 %v1929, %v1957
      %v1982 = vadd.f32 %v1930, %v1958
      %v1983 = vadd.f32 %v1931, %v1959
      %v1984 = vadd.f32 %v1932, %v1960
      %v1985 = vadd.f32 %v1933, %v1961
      %v1986 = vadd.f32 %v1934, %v1962
      %v1987 = vadd.f32 %v1935, %v1963
      %v1988 = vadd.f32 %v1936, %v1964
      %v1989 = vadd.f32 %v1937, %v1965
      %v1990 = vadd.f32 %v1938, %v1966
      %v1991 = vadd.f32 %v1939, %v1967
      %v1992 = vadd.f32 %v1940, %v1968
      %v1993 = vadd.f32 %v1941, %v1969
      %v1994 = vadd.f32 %v1942, %v1970
      %v1995 = vadd.f32 %v1943, %v1971
      %v1996 = vadd.f32 %v1944, %v1972
      %v1997 = vadd.f32 %v1945, %v1973
      %v1998 = vadd.f32 %v1946, %v1974
      %v1999 = vadd.f32 %v1947, %v1975
      %v2000 = vadd.f32 %v1948, %v1976
      %v2001 = vlaneseq
      %v2002 = vshrl.u32 %v2001, 7
      %v2003 = vsub.s32 2, %v2002
      %v2004 = vrot.slane %v1836, %v2003
      %v2005 = vmul.f32 %v1747, %v2004
      %v2006 = vmul.f32 %v1749, %v2004
      %v2007 = vmul.f32 %v1751, %v2004
      %v2008 = vmul.f32 %v1753, %v2004
      %v2009 = vmul.f32 %v1755, %v2004
      %v2010 = vmul.f32 %v1757, %v2004
      %v2011 = vmul.f32 %v1759, %v2004
      %v2012 = vmul.f32 %v1761, %v2004
      %v2013 = vmul.f32 %v1763, %v2004
      %v2014 = vmul.f32 %v1765, %v2004
      %v2015 = vmul.f32 %v1767, %v2004
      %v2016 = vmul.f32 %v1769, %v2004
      %v2017 = vmul.f32 %v1771, %v2004
      %v2018 = vmul.f32 %v1773, %v2004
      %v2019 = vmul.f32 %v1775, %v2004
      %v2020 = vmul.f32 %v1777, %v2004
      %v2021 = vmul.f32 %v1779, %v2004
      %v2022 = vmul.f32 %v1781, %v2004
      %v2023 = vmul.f32 %v1783, %v2004
      %v2024 = vmul.f32 %v1785, %v2004
      %v2025 = vmul.f32 %v1787, %v2004
      %v2026 = vmul.f32 %v1789, %v2004
      %v2027 = vmul.f32 %v1791, %v2004
      %v2028 = vmul.f32 %v1793, %v2004
      %v2029 = vadd.f32 %v1977, %v2005
      %v2030 = vadd.f32 %v1978, %v2006
      %v2031 = vadd.f32 %v1979, %v2007
      %v2032 = vadd.f32 %v1980, %v2008
      %v2033 = vadd.f32 %v1981, %v2009
      %v2034 = vadd.f32 %v1982, %v2010
      %v2035 = vadd.f32 %v1983, %v2011
      %v2036 = vadd.f32 %v1984, %v2012
      %v2037 = vadd.f32 %v1985, %v2013
      %v2038 = vadd.f32 %v1986, %v2014
      %v2039 = vadd.f32 %v1987, %v2015
      %v2040 = vadd.f32 %v1988, %v2016
      %v2041 = vadd.f32 %v1989, %v2017
      %v2042 = vadd.f32 %v1990, %v2018
      %v2043 = vadd.f32 %v1991, %v2019
      %v2044 = vadd.f32 %v1992, %v2020
      %v2045 = vadd.f32 %v1993, %v2021
      %v2046 = vadd.f32 %v1994, %v2022
      %v2047 = vadd.f32 %v1995, %v2023
      %v2048 = vadd.f32 %v1996, %v2024
      %v2049 = vadd.f32 %v1997, %v2025
      %v2050 = vadd.f32 %v1998, %v2026
      %v2051 = vadd.f32 %v1999, %v2027
      %v2052 = vadd.f32 %v2000, %v2028
      %v2053 = vlaneseq
      %v2054 = vshrl.u32 %v2053, 7
      %v2055 = vsub.s32 3, %v2054
      %v2056 = vrot.slane %v1836, %v2055
      %v2057 = vmul.f32 %v1662, %v2056
      %v2058 = vmul.f32 %v1664, %v2056
      %v2059 = vmul.f32 %v1666, %v2056
      %v2060 = vmul.f32 %v1668, %v2056
      %v2061 = vmul.f32 %v1670, %v2056
      %v2062 = vmul.f32 %v1672, %v2056
      %v2063 = vmul.f32 %v1674, %v2056
      %v2064 = vmul.f32 %v1676, %v2056
      %v2065 = vmul.f32 %v1678, %v2056
      %v2066 = vmul.f32 %v1680, %v2056
      %v2067 = vmul.f32 %v1682, %v2056
      %v2068 = vmul.f32 %v1684, %v2056
      %v2069 = vmul.f32 %v1686, %v2056
      %v2070 = vmul.f32 %v1688, %v2056
      %v2071 = vmul.f32 %v1690, %v2056
      %v2072 = vmul.f32 %v1692, %v2056
      %v2073 = vmul.f32 %v1694, %v2056
      %v2074 = vmul.f32 %v1696, %v2056
      %v2075 = vmul.f32 %v1698, %v2056
      %v2076 = vmul.f32 %v1700, %v2056
      %v2077 = vmul.f32 %v1702, %v2056
      %v2078 = vmul.f32 %v1704, %v2056
      %v2079 = vmul.f32 %v1706, %v2056
      %v2080 = vmul.f32 %v1708, %v2056
      %v2081 = vadd.f32 %v2029, %v2057
      %v2082 = vadd.f32 %v2030, %v2058
      %v2083 = vadd.f32 %v2031, %v2059
      %v2084 = vadd.f32 %v2032, %v2060
      %v2085 = vadd.f32 %v2033, %v2061
      %v2086 = vadd.f32 %v2034, %v2062
      %v2087 = vadd.f32 %v2035, %v2063
      %v2088 = vadd.f32 %v2036, %v2064
      %v2089 = vadd.f32 %v2037, %v2065
      %v2090 = vadd.f32 %v2038, %v2066
      %v2091 = vadd.f32 %v2039, %v2067
      %v2092 = vadd.f32 %v2040, %v2068
      %v2093 = vadd.f32 %v2041, %v2069
      %v2094 = vadd.f32 %v2042, %v2070
      %v2095 = vadd.f32 %v2043, %v2071
      %v2096 = vadd.f32 %v2044, %v2072
      %v2097 = vadd.f32 %v2045, %v2073
      %v2098 = vadd.f32 %v2046, %v2074
      %v2099 = vadd.f32 %v2047, %v2075
      %v2100 = vadd.f32 %v2048, %v2076
      %v2101 = vadd.f32 %v2049, %v2077
      %v2102 = vadd.f32 %v2050, %v2078
      %v2103 = vadd.f32 %v2051, %v2079
      %v2104 = vadd.f32 %v2052, %v2080
      %v2105 = vlaneseq
      %v2106 = vshrl.u32 %v2105, 7
      %v2107 = vsub.s32 5, %v2106
      %v2108 = vrot.slane %v1836, %v2107
      %v2109 = vmul.f32 %v1753, %v2108
      %v2110 = vmul.f32 %v1755, %v2108
      %v2111 = vmul.f32 %v1757, %v2108
      %v2112 = vmul.f32 %v1759, %v2108
      %v2113 = vmul.f32 %v1761, %v2108
      %v2114 = vmul.f32 %v1763, %v2108
      %v2115 = vmul.f32 %v1765, %v2108
      %v2116 = vmul.f32 %v1767, %v2108
      %v2117 = vmul.f32 %v1769, %v2108
      %v2118 = vmul.f32 %v1771, %v2108
      %v2119 = vmul.f32 %v1773, %v2108
      %v2120 = vmul.f32 %v1775, %v2108
      %v2121 = vmul.f32 %v1777, %v2108
      %v2122 = vmul.f32 %v1779, %v2108
      %v2123 = vmul.f32 %v1781, %v2108
      %v2124 = vmul.f32 %v1783, %v2108
      %v2125 = vmul.f32 %v1785, %v2108
      %v2126 = vmul.f32 %v1787, %v2108
      %v2127 = vmul.f32 %v1789, %v2108
      %v2128 = vmul.f32 %v1791, %v2108
      %v2129 = vmul.f32 %v1793, %v2108
      %v2130 = vmul.f32 %v1795, %v2108
      %v2131 = vmul.f32 %v1797, %v2108
      %v2132 = vmul.f32 %v1799, %v2108
      %v2133 = vadd.f32 %v2081, %v2109
      %v2134 = vadd.f32 %v2082, %v2110
      %v2135 = vadd.f32 %v2083, %v2111
      %v2136 = vadd.f32 %v2084, %v2112
      %v2137 = vadd.f32 %v2085, %v2113
      %v2138 = vadd.f32 %v2086, %v2114
      %v2139 = vadd.f32 %v2087, %v2115
      %v2140 = vadd.f32 %v2088, %v2116
      %v2141 = vadd.f32 %v2089, %v2117
      %v2142 = vadd.f32 %v2090, %v2118
      %v2143 = vadd.f32 %v2091, %v2119
      %v2144 = vadd.f32 %v2092, %v2120
      %v2145 = vadd.f32 %v2093, %v2121
      %v2146 = vadd.f32 %v2094, %v2122
      %v2147 = vadd.f32 %v2095, %v2123
      %v2148 = vadd.f32 %v2096, %v2124
      %v2149 = vadd.f32 %v2097, %v2125
      %v2150 = vadd.f32 %v2098, %v2126
      %v2151 = vadd.f32 %v2099, %v2127
      %v2152 = vadd.f32 %v2100, %v2128
      %v2153 = vadd.f32 %v2101, %v2129
      %v2154 = vadd.f32 %v2102, %v2130
      %v2155 = vadd.f32 %v2103, %v2131
      %v2156 = vadd.f32 %v2104, %v2132
      %v2157 = vlaneseq
      %v2158 = vshrl.u32 %v2157, 7
      %v2159 = vsub.s32 6, %v2158
      %v2160 = vrot.slane %v1836, %v2159
      %v2161 = vmul.f32 %v1668, %v2160
      %v2162 = vmul.f32 %v1670, %v2160
      %v2163 = vmul.f32 %v1672, %v2160
      %v2164 = vmul.f32 %v1674, %v2160
      %v2165 = vmul.f32 %v1676, %v2160
      %v2166 = vmul.f32 %v1678, %v2160
      %v2167 = vmul.f32 %v1680, %v2160
      %v2168 = vmul.f32 %v1682, %v2160
      %v2169 = vmul.f32 %v1684, %v2160
      %v2170 = vmul.f32 %v1686, %v2160
      %v2171 = vmul.f32 %v1688, %v2160
      %v2172 = vmul.f32 %v1690, %v2160
      %v2173 = vmul.f32 %v1692, %v2160
      %v2174 = vmul.f32 %v1694, %v2160
      %v2175 = vmul.f32 %v1696, %v2160
      %v2176 = vmul.f32 %v1698, %v2160
      %v2177 = vmul.f32 %v1700, %v2160
      %v2178 = vmul.f32 %v1702, %v2160
      %v2179 = vmul.f32 %v1704, %v2160
      %v2180 = vmul.f32 %v1706, %v2160
      %v2181 = vmul.f32 %v1708, %v2160
      %v2182 = vmul.f32 %v1710, %v2160
      %v2183 = vmul.f32 %v1712, %v2160
      %v2184 = vmul.f32 %v1713, %v2160
      %v2185 = vadd.f32 %v2133, %v2161
      %v2186 = vadd.f32 %v2134, %v2162
      %v2187 = vadd.f32 %v2135, %v2163
      %v2188 = vadd.f32 %v2136, %v2164
      %v2189 = vadd.f32 %v2137, %v2165
      %v2190 = vadd.f32 %v2138, %v2166
      %v2191 = vadd.f32 %v2139, %v2167
      %v2192 = vadd.f32 %v2140, %v2168
      %v2193 = vadd.f32 %v2141, %v2169
      %v2194 = vadd.f32 %v2142, %v2170
      %v2195 = vadd.f32 %v2143, %v2171
      %v2196 = vadd.f32 %v2144, %v2172
      %v2197 = vadd.f32 %v2145, %v2173
      %v2198 = vadd.f32 %v2146, %v2174
      %v2199 = vadd.f32 %v2147, %v2175
      %v2200 = vadd.f32 %v2148, %v2176
      %v2201 = vadd.f32 %v2149, %v2177
      %v2202 = vadd.f32 %v2150, %v2178
      %v2203 = vadd.f32 %v2151, %v2179
      %v2204 = vadd.f32 %v2152, %v2180
      %v2205 = vadd.f32 %v2153, %v2181
      %v2206 = vadd.f32 %v2154, %v2182
      %v2207 = vadd.f32 %v2155, %v2183
      %v2208 = vadd.f32 %v2156, %v2184
      %v2209 = vlaneseq
      %v2210 = vshrl.u32 %v2209, 7
      %v2211 = vsub.s32 7, %v2210
      %v2212 = vrot.slane %v1836, %v2211
      %v2213 = vmul.f32 %v1506, %v2212
      %v2214 = vmul.f32 %v1511, %v2212
      %v2215 = vmul.f32 %v1516, %v2212
      %v2216 = vmul.f32 %v1521, %v2212
      %v2217 = vmul.f32 %v1526, %v2212
      %v2218 = vmul.f32 %v1531, %v2212
      %v2219 = vmul.f32 %v1536, %v2212
      %v2220 = vmul.f32 %v1541, %v2212
      %v2221 = vmul.f32 %v1546, %v2212
      %v2222 = vmul.f32 %v1551, %v2212
      %v2223 = vmul.f32 %v1556, %v2212
      %v2224 = vmul.f32 %v1561, %v2212
      %v2225 = vmul.f32 %v1566, %v2212
      %v2226 = vmul.f32 %v1571, %v2212
      %v2227 = vmul.f32 %v1576, %v2212
      %v2228 = vmul.f32 %v1581, %v2212
      %v2229 = vmul.f32 %v1586, %v2212
      %v2230 = vmul.f32 %v1591, %v2212
      %v2231 = vmul.f32 %v1596, %v2212
      %v2232 = vmul.f32 %v1601, %v2212
      %v2233 = vmul.f32 %v1606, %v2212
      %v2234 = vmul.f32 %v1611, %v2212
      %v2235 = vmul.f32 %v1616, %v2212
      %v2236 = vmul.f32 %v1621, %v2212
      %v2237 = vadd.f32 %v2185, %v2213
      %v2238 = vadd.f32 %v2186, %v2214
      %v2239 = vadd.f32 %v2187, %v2215
      %v2240 = vadd.f32 %v2188, %v2216
      %v2241 = vadd.f32 %v2189, %v2217
      %v2242 = vadd.f32 %v2190, %v2218
      %v2243 = vadd.f32 %v2191, %v2219
      %v2244 = vadd.f32 %v2192, %v2220
      %v2245 = vadd.f32 %v2193, %v2221
      %v2246 = vadd.f32 %v2194, %v2222
      %v2247 = vadd.f32 %v2195, %v2223
      %v2248 = vadd.f32 %v2196, %v2224
      %v2249 = vadd.f32 %v2197, %v2225
      %v2250 = vadd.f32 %v2198, %v2226
      %v2251 = vadd.f32 %v2199, %v2227
      %v2252 = vadd.f32 %v2200, %v2228
      %v2253 = vadd.f32 %v2201, %v2229
      %v2254 = vadd.f32 %v2202, %v2230
      %v2255 = vadd.f32 %v2203, %v2231
      %v2256 = vadd.f32 %v2204, %v2232
      %v2257 = vadd.f32 %v2205, %v2233
      %v2258 = vadd.f32 %v2206, %v2234
      %v2259 = vadd.f32 %v2207, %v2235
      %v2260 = vadd.f32 %v2208, %v2236
      %v2261 = vlaneseq
      %v2262 = vshrl.u32 %v2261, 7
      %v2263 = vsub.s32 0, %v2262
      %v2264 = vrot.slane %v1837, %v2263
      %v2265 = vmul.f32 %v1759, %v2264
      %v2266 = vmul.f32 %v1761, %v2264
      %v2267 = vmul.f32 %v1763, %v2264
      %v2268 = vmul.f32 %v1765, %v2264
      %v2269 = vmul.f32 %v1767, %v2264
      %v2270 = vmul.f32 %v1769, %v2264
      %v2271 = vmul.f32 %v1771, %v2264
      %v2272 = vmul.f32 %v1773, %v2264
      %v2273 = vmul.f32 %v1775, %v2264
      %v2274 = vmul.f32 %v1777, %v2264
      %v2275 = vmul.f32 %v1779, %v2264
      %v2276 = vmul.f32 %v1781, %v2264
      %v2277 = vmul.f32 %v1783, %v2264
      %v2278 = vmul.f32 %v1785, %v2264
      %v2279 = vmul.f32 %v1787, %v2264
      %v2280 = vmul.f32 %v1789, %v2264
      %v2281 = vmul.f32 %v1791, %v2264
      %v2282 = vmul.f32 %v1793, %v2264
      %v2283 = vmul.f32 %v1795, %v2264
      %v2284 = vmul.f32 %v1797, %v2264
      %v2285 = vmul.f32 %v1799, %v2264
      %v2286 = vmul.f32 %v1801, %v2264
      %v2287 = vmul.f32 %v1803, %v2264
      %v2288 = vmul.f32 %v1835, %v2264
      %v2289 = vadd.f32 %v2237, %v2265
      %v2290 = vadd.f32 %v2238, %v2266
      %v2291 = vadd.f32 %v2239, %v2267
      %v2292 = vadd.f32 %v2240, %v2268
      %v2293 = vadd.f32 %v2241, %v2269
      %v2294 = vadd.f32 %v2242, %v2270
      %v2295 = vadd.f32 %v2243, %v2271
      %v2296 = vadd.f32 %v2244, %v2272
      %v2297 = vadd.f32 %v2245, %v2273
      %v2298 = vadd.f32 %v2246, %v2274
      %v2299 = vadd.f32 %v2247, %v2275
      %v2300 = vadd.f32 %v2248, %v2276
      %v2301 = vadd.f32 %v2249, %v2277
      %v2302 = vadd.f32 %v2250, %v2278
      %v2303 = vadd.f32 %v2251, %v2279
      %v2304 = vadd.f32 %v2252, %v2280
      %v2305 = vadd.f32 %v2253, %v2281
      %v2306 = vadd.f32 %v2254, %v2282
      %v2307 = vadd.f32 %v2255, %v2283
      %v2308 = vadd.f32 %v2256, %v2284
      %v2309 = vadd.f32 %v2257, %v2285
      %v2310 = vadd.f32 %v2258, %v2286
      %v2311 = vadd.f32 %v2259, %v2287
      %v2312 = vadd.f32 %v2260, %v2288
      %v2313 = vmul.f32 %v1380, 0.5
      %v2314 = vmul.f32 %v1381, 0.5
      %v2315 = vmul.f32 %v1382, 0.5
      %v2316 = vmul.f32 %v1383, 0.5
      %v2317 = vmul.f32 %v1384, 0.5
      %v2318 = vmul.f32 %v1385, 0.5
      %v2319 = vmul.f32 %v1386, 0.5
      %v2320 = vmul.f32 %v1387, 0.5
      %v2321 = vmul.f32 %v1388, 0.5
      %v2322 = vmul.f32 %v1389, 0.5
      %v2323 = vmul.f32 %v1390, 0.5
      %v2324 = vmul.f32 %v1391, 0.5
      %v2325 = vmul.f32 %v1392, 0.5
      %v2326 = vmul.f32 %v1393, 0.5
      %v2327 = vmul.f32 %v1394, 0.5
      %v2328 = vmul.f32 %v1395, 0.5
      %v2329 = vmul.f32 %v1396, 0.5
      %v2330 = vmul.f32 %v1397, 0.5
      %v2331 = vmul.f32 %v1398, 0.5
      %v2332 = vmul.f32 %v1399, 0.5
      %v2333 = vmul.f32 %v1400, 0.5
      %v2334 = vmul.f32 %v1401, 0.5
      %v2335 = vmul.f32 %v1402, 0.5
      %v2336 = vmul.f32 %v1403, 0.5
      %v2337 = vmul.f32 %v1380, 0.70710677
      %v2338 = vmul.f32 %v1381, 0.70710677
      %v2339 = vmul.f32 %v1382, 0.70710677
      %v2340 = vmul.f32 %v1383, 0.70710677
      %v2341 = vmul.f32 %v1384, 0.70710677
      %v2342 = vmul.f32 %v1385, 0.70710677
      %v2343 = vmul.f32 %v1386, 0.70710677
      %v2344 = vmul.f32 %v1387, 0.70710677
      %v2345 = vmul.f32 %v1388, 0.70710677
      %v2346 = vmul.f32 %v1389, 0.70710677
      %v2347 = vmul.f32 %v1390, 0.70710677
      %v2348 = vmul.f32 %v1391, 0.70710677
      %v2349 = vmul.f32 %v1392, 0.70710677
      %v2350 = vmul.f32 %v1393, 0.70710677
      %v2351 = vmul.f32 %v1394, 0.70710677
      %v2352 = vmul.f32 %v1395, 0.70710677
      %v2353 = vmul.f32 %v1396, 0.70710677
      %v2354 = vmul.f32 %v1397, 0.70710677
      %v2355 = vmul.f32 %v1398, 0.70710677
      %v2356 = vmul.f32 %v1399, 0.70710677
      %v2357 = vmul.f32 %v1400, 0.70710677
      %v2358 = vmul.f32 %v1401, 0.70710677
      %v2359 = vmul.f32 %v1402, 0.70710677
      %v2360 = vmul.f32 %v1403, 0.70710677
      %v2361 = verf.f32.pop %v2337
      %v2362 = verf.f32.pop %v2338
      %v2363 = verf.f32.pop %v2339
      %v2364 = verf.f32.pop %v2340
      %v2365 = verf.f32.pop %v2341
      %v2366 = verf.f32.pop %v2342
      %v2367 = verf.f32.pop %v2343
      %v2368 = verf.f32.pop %v2344
      %v2369 = verf.f32.pop %v2345
      %v2370 = verf.f32.pop %v2346
      %v2371 = verf.f32.pop %v2347
      %v2372 = verf.f32.pop %v2348
      %v2373 = verf.f32.pop %v2349
      %v2374 = verf.f32.pop %v2350
      %v2375 = verf.f32.pop %v2351
      %v2376 = verf.f32.pop %v2352
      %v2377 = verf.f32.pop %v2353
      %v2378 = verf.f32.pop %v2354
      %v2379 = verf.f32.pop %v2355
      %v2380 = verf.f32.pop %v2356
      %v2381 = verf.f32.pop %v2357
      %v2382 = verf.f32.pop %v2358
      %v2383 = verf.f32.pop %v2359
      %v2384 = verf.f32.pop %v2360
      %v2385 = vadd.f32 %v2361, 1.0
      %v2386 = vadd.f32 %v2362, 1.0
      %v2387 = vadd.f32 %v2363, 1.0
      %v2388 = vadd.f32 %v2364, 1.0
      %v2389 = vadd.f32 %v2365, 1.0
      %v2390 = vadd.f32 %v2366, 1.0
      %v2391 = vadd.f32 %v2367, 1.0
      %v2392 = vadd.f32 %v2368, 1.0
      %v2393 = vadd.f32 %v2369, 1.0
      %v2394 = vadd.f32 %v2370, 1.0
      %v2395 = vadd.f32 %v2371, 1.0
      %v2396 = vadd.f32 %v2372, 1.0
      %v2397 = vadd.f32 %v2373, 1.0
      %v2398 = vadd.f32 %v2374, 1.0
      %v2399 = vadd.f32 %v2375, 1.0
      %v2400 = vadd.f32 %v2376, 1.0
      %v2401 = vadd.f32 %v2377, 1.0
      %v2402 = vadd.f32 %v2378, 1.0
      %v2403 = vadd.f32 %v2379, 1.0
      %v2404 = vadd.f32 %v2380, 1.0
      %v2405 = vadd.f32 %v2381, 1.0
      %v2406 = vadd.f32 %v2382, 1.0
      %v2407 = vadd.f32 %v2383, 1.0
      %v2408 = vadd.f32 %v2384, 1.0
      %v2409 = vmul.f32 %v2313, %v2385
      %v2410 = vmul.f32 %v2314, %v2386
      %v2411 = vmul.f32 %v2315, %v2387
      %v2412 = vmul.f32 %v2316, %v2388
      %v2413 = vmul.f32 %v2317, %v2389
      %v2414 = vmul.f32 %v2318, %v2390
      %v2415 = vmul.f32 %v2319, %v2391
      %v2416 = vmul.f32 %v2320, %v2392
      %v2417 = vmul.f32 %v2321, %v2393
      %v2418 = vmul.f32 %v2322, %v2394
      %v2419 = vmul.f32 %v2323, %v2395
      %v2420 = vmul.f32 %v2324, %v2396
      %v2421 = vmul.f32 %v2325, %v2397
      %v2422 = vmul.f32 %v2326, %v2398
      %v2423 = vmul.f32 %v2327, %v2399
      %v2424 = vmul.f32 %v2328, %v2400
      %v2425 = vmul.f32 %v2329, %v2401
      %v2426 = vmul.f32 %v2330, %v2402
      %v2427 = vmul.f32 %v2331, %v2403
      %v2428 = vmul.f32 %v2332, %v2404
      %v2429 = vmul.f32 %v2333, %v2405
      %v2430 = vmul.f32 %v2334, %v2406
      %v2431 = vmul.f32 %v2335, %v2407
      %v2432 = vmul.f32 %v2336, %v2408
      %v2433 = vmul.f32 %v2409, %v2289
      %v2434 = vmul.f32 %v2410, %v2290
      %v2435 = vmul.f32 %v2411, %v2291
      %v2436 = vmul.f32 %v2412, %v2292
      %v2437 = vmul.f32 %v2413, %v2293
      %v2438 = vmul.f32 %v2414, %v2294
      %v2439 = vmul.f32 %v2415, %v2295
      %v2440 = vmul.f32 %v2416, %v2296
      %v2441 = vmul.f32 %v2417, %v2297
      %v2442 = vmul.f32 %v2418, %v2298
      %v2443 = vmul.f32 %v2419, %v2299
      %v2444 = vmul.f32 %v2420, %v2300
      %v2445 = vmul.f32 %v2421, %v2301
      %v2446 = vmul.f32 %v2422, %v2302
      %v2447 = vmul.f32 %v2423, %v2303
      %v2448 = vmul.f32 %v2424, %v2304
      %v2449 = vmul.f32 %v2425, %v2305
      %v2450 = vmul.f32 %v2426, %v2306
      %v2451 = vmul.f32 %v2427, %v2307
      %v2452 = vmul.f32 %v2428, %v2308
      %v2453 = vmul.f32 %v2429, %v2309
      %v2454 = vmul.f32 %v2430, %v2310
      %v2455 = vmul.f32 %v2431, %v2311
      %v2456 = vmul.f32 %v2432, %v2312
      %v2457 = vld [vmem:[%s7] sm:$0xff]
      %v2458 = vld [vmem:[%s7 + $0x8] sm:$0xff]
      %v2459 = vld [vmem:[%s8] sm:$0x1]
      %v2461 = vlaneseq
      %v2462 = vshrl.u32 %v2461, 7
      %v2463 = vsub.s32 0, %v2462
      %v2464 = vrot.slane %v2459, %v2463
      %vm2466 = vcmask 130048
      %v2468 = vsel %vm2466, %v2433, 0
      %v2471 = vsel %vm2466, %v2434, 0
      %v2474 = vsel %vm2466, %v2435, 0
      %v2477 = vsel %vm2466, %v2436, 0
      %v2480 = vsel %vm2466, %v2437, 0
      %v2483 = vsel %vm2466, %v2438, 0
      %v2486 = vsel %vm2466, %v2439, 0
      %v2489 = vsel %vm2466, %v2440, 0
      %v2492 = vsel %vm2466, %v2441, 0
      %v2495 = vsel %vm2466, %v2442, 0
      %v2498 = vsel %vm2466, %v2443, 0
      %v2501 = vsel %vm2466, %v2444, 0
      %v2504 = vsel %vm2466, %v2445, 0
      %v2507 = vsel %vm2466, %v2446, 0
      %v2510 = vsel %vm2466, %v2447, 0
      %v2513 = vsel %vm2466, %v2448, 0
      %v2516 = vsel %vm2466, %v2449, 0
      %v2519 = vsel %vm2466, %v2450, 0
      %v2522 = vsel %vm2466, %v2451, 0
      %v2525 = vsel %vm2466, %v2452, 0
      %v2528 = vsel %vm2466, %v2453, 0
      %v2531 = vsel %vm2466, %v2454, 0
      %v2534 = vsel %vm2466, %v2455, 0
      %v2537 = vsel %vm2466, %v2456, 0
      %2539 = vmatprep.subr.mxu0 0.0
      %2540 = vmatpush1.msra.mxu0 %v2457
      %2541 = vmatprep.subr.mxu0 0.0
      %2542 = vmatpush1.msra.mxu0 %v2458
      %2543 = vmatprep.subr.mxu0 0.0
      %2544 = vmatpush1.msra.mxu0 0.0
      %2545 = vmatprep.subr.mxu0 0.0
      %2546 = vmatpush1.msra.mxu0 0.0
      %2547 = vmatprep.subr.mxu0 0.0
      %2548 = vmatpush1.msra.mxu0 0.0
      %2549 = vmatprep.subr.mxu0 0.0
      %2550 = vmatpush1.msra.mxu0 0.0
      %2551 = vmatprep.subr.mxu0 0.0
      %2552 = vmatpush1.msra.mxu0 0.0
      %2553 = vmatprep.subr.mxu0 0.0
      %2554 = vmatpush1.msra.mxu0 0.0
      %2555 = vmatprep.subr.mxu0 0.0
      %2556 = vmatpush1.msra.mxu0 0.0
      %2557 = vmatprep.subr.mxu0 0.0
      %2558 = vmatpush1.msra.mxu0 0.0
      %2559 = vmatprep.subr.mxu0 0.0
      %2560 = vmatpush1.msra.mxu0 0.0
      %2561 = vmatprep.subr.mxu0 0.0
      %2562 = vmatpush1.msra.mxu0 0.0
      %2563 = vmatprep.subr.mxu0 0.0
      %2564 = vmatpush1.msra.mxu0 0.0
      %2565 = vmatprep.subr.mxu0 0.0
      %2566 = vmatpush1.msra.mxu0 0.0
      %2567 = vmatprep.subr.mxu0 0.0
      %2568 = vmatpush1.msra.mxu0 0.0
      %2569 = vmatprep.subr.mxu0 0.0
      %2570 = vmatpush1.msra.mxu0 0.0
      %2571 = vmatprep.subr.mxu0 0.0
      %2572 = vmatpush1.msra.mxu0 0.0
      %2573 = vmatprep.subr.mxu0 0.0
      %2574 = vmatpush1.msra.mxu0 0.0
      %2575 = vmatprep.subr.mxu0 0.0
      %2576 = vmatpush1.msra.mxu0 0.0
      %2577 = vmatprep.subr.mxu0 0.0
      %2578 = vmatpush1.msra.mxu0 0.0
      %2579 = vmatprep.subr.mxu0 0.0
      %2580 = vmatpush1.msra.mxu0 0.0
      %2581 = vmatprep.subr.mxu0 0.0
      %2582 = vmatpush1.msra.mxu0 0.0
      %2583 = vmatprep.subr.mxu0 0.0
      %2584 = vmatpush1.msra.mxu0 0.0
      %2585 = vmatprep.subr.mxu0 0.0
      %2586 = vmatpush1.msra.mxu0 0.0
      %2587 = vmatprep.subr.mxu0 0.0
      %2588 = vmatpush1.msra.mxu0 0.0
      %2589 = vmatprep.subr.mxu0 0.0
      %2590 = vmatpush1.msra.mxu0 0.0
      %2591 = vmatprep.subr.mxu0 0.0
      %2592 = vmatpush1.msra.mxu0 0.0
      %2593 = vmatprep.subr.mxu0 0.0
      %2594 = vmatpush1.msra.mxu0 0.0
      %2595 = vmatprep.subr.mxu0 0.0
      %2596 = vmatpush1.msra.mxu0 0.0
      %2597 = vmatprep.subr.mxu0 0.0
      %2598 = vmatpush1.msra.mxu0 0.0
      %2599 = vmatprep.subr.mxu0 0.0
      %2600 = vmatpush1.msra.mxu0 0.0
      %2601 = vmatprep.subr.mxu0 0.0
      %2602 = vmatpush1.msra.mxu0 0.0
      %2603 = vmatprep.mubr.f32.mxu0 0.0
      %2604 = vmatmul.mubr.f32.gmra.mrb[0].mxu0 %v2468
      %v2605 = vpop.f32.mrb[0].mxu0
      %v2606 = vadd.f32 %v2464, %v2605
      %v2607 = vpop.f32.mrb[0].mxu0
      %2608 = vmatprep.mubr.f32.mxu0 0.0
      %2609 = vmatmul.mubr.f32.gmra.mrb[0].mxu0 %v2471
      %v2610 = vpop.f32.mrb[0].mxu0
      %v2611 = vadd.f32 %v2464, %v2610
      %v2612 = vpop.f32.mrb[0].mxu0
      %2613 = vmatprep.mubr.f32.mxu0 0.0
      %2614 = vmatmul.mubr.f32.gmra.mrb[0].mxu0 %v2474
      %v2615 = vpop.f32.mrb[0].mxu0
      %v2616 = vadd.f32 %v2464, %v2615
      %v2617 = vpop.f32.mrb[0].mxu0
      %2618 = vmatprep.mubr.f32.mxu0 0.0
      %2619 = vmatmul.mubr.f32.gmra.mrb[0].mxu0 %v2477
      %v2620 = vpop.f32.mrb[0].mxu0
      %v2621 = vadd.f32 %v2464, %v2620
      %v2622 = vpop.f32.mrb[0].mxu0
      %2623 = vmatprep.mubr.f32.mxu0 0.0
      %2624 = vmatmul.mubr.f32.gmra.mrb[0].mxu0 %v2480
      %v2625 = vpop.f32.mrb[0].mxu0
      %v2626 = vadd.f32 %v2464, %v2625
      %v2627 = vpop.f32.mrb[0].mxu0
      %2628 = vmatprep.mubr.f32.mxu0 0.0
      %2629 = vmatmul.mubr.f32.gmra.mrb[0].mxu0 %v2483
      %v2630 = vpop.f32.mrb[0].mxu0
      %v2631 = vadd.f32 %v2464, %v2630
      %v2632 = vpop.f32.mrb[0].mxu0
      %2633 = vmatprep.mubr.f32.mxu0 0.0
      %2634 = vmatmul.mubr.f32.gmra.mrb[0].mxu0 %v2486
      %v2635 = vpop.f32.mrb[0].mxu0
      %v2636 = vadd.f32 %v2464, %v2635
      %v2637 = vpop.f32.mrb[0].mxu0
      %2638 = vmatprep.mubr.f32.mxu0 0.0
      %2639 = vmatmul.mubr.f32.gmra.mrb[0].mxu0 %v2489
      %v2640 = vpop.f32.mrb[0].mxu0
      %v2641 = vadd.f32 %v2464, %v2640
      %v2642 = vpop.f32.mrb[0].mxu0
      %2643 = vmatprep.mubr.f32.mxu0 0.0
      %2644 = vmatmul.mubr.f32.gmra.mrb[0].mxu0 %v2492
      %v2645 = vpop.f32.mrb[0].mxu0
      %v2646 = vadd.f32 %v2464, %v2645
      %v2647 = vpop.f32.mrb[0].mxu0
      %2648 = vmatprep.mubr.f32.mxu0 0.0
      %2649 = vmatmul.mubr.f32.gmra.mrb[0].mxu0 %v2495
      %v2650 = vpop.f32.mrb[0].mxu0
      %v2651 = vadd.f32 %v2464, %v2650
      %v2652 = vpop.f32.mrb[0].mxu0
      %2653 = vmatprep.mubr.f32.mxu0 0.0
      %2654 = vmatmul.mubr.f32.gmra.mrb[0].mxu0 %v2498
      %v2655 = vpop.f32.mrb[0].mxu0
      %v2656 = vadd.f32 %v2464, %v2655
      %v2657 = vpop.f32.mrb[0].mxu0
      %2658 = vmatprep.mubr.f32.mxu0 0.0
      %2659 = vmatmul.mubr.f32.gmra.mrb[0].mxu0 %v2501
      %v2660 = vpop.f32.mrb[0].mxu0
      %v2661 = vadd.f32 %v2464, %v2660
      %v2662 = vpop.f32.mrb[0].mxu0
      %2663 = vmatprep.mubr.f32.mxu0 0.0
      %2664 = vmatmul.mubr.f32.gmra.mrb[0].mxu0 %v2504
      %v2665 = vpop.f32.mrb[0].mxu0
      %v2666 = vadd.f32 %v2464, %v2665
      %v2667 = vpop.f32.mrb[0].mxu0
      %2668 = vmatprep.mubr.f32.mxu0 0.0
      %2669 = vmatmul.mubr.f32.gmra.mrb[0].mxu0 %v2507
      %v2670 = vpop.f32.mrb[0].mxu0
      %v2671 = vadd.f32 %v2464, %v2670
      %v2672 = vpop.f32.mrb[0].mxu0
      %2673 = vmatprep.mubr.f32.mxu0 0.0
      %2674 = vmatmul.mubr.f32.gmra.mrb[0].mxu0 %v2510
      %v2675 = vpop.f32.mrb[0].mxu0
      %v2676 = vadd.f32 %v2464, %v2675
      %v2677 = vpop.f32.mrb[0].mxu0
      %2678 = vmatprep.mubr.f32.mxu0 0.0
      %2679 = vmatmul.mubr.f32.gmra.mrb[0].mxu0 %v2513
      %v2680 = vpop.f32.mrb[0].mxu0
      %v2681 = vadd.f32 %v2464, %v2680
      %v2682 = vpop.f32.mrb[0].mxu0
      %2683 = vmatprep.mubr.f32.mxu0 0.0
      %2684 = vmatmul.mubr.f32.gmra.mrb[0].mxu0 %v2516
      %v2685 = vpop.f32.mrb[0].mxu0
      %v2686 = vadd.f32 %v2464, %v2685
      %v2687 = vpop.f32.mrb[0].mxu0
      %2688 = vmatprep.mubr.f32.mxu0 0.0
      %2689 = vmatmul.mubr.f32.gmra.mrb[0].mxu0 %v2519
      %v2690 = vpop.f32.mrb[0].mxu0
      %v2691 = vadd.f32 %v2464, %v2690
      %v2692 = vpop.f32.mrb[0].mxu0
      %2693 = vmatprep.mubr.f32.mxu0 0.0
      %2694 = vmatmul.mubr.f32.gmra.mrb[0].mxu0 %v2522
      %v2695 = vpop.f32.mrb[0].mxu0
      %v2696 = vadd.f32 %v2464, %v2695
      %v2697 = vpop.f32.mrb[0].mxu0
      %2698 = vmatprep.mubr.f32.mxu0 0.0
      %2699 = vmatmul.mubr.f32.gmra.mrb[0].mxu0 %v2525
      %v2700 = vpop.f32.mrb[0].mxu0
      %v2701 = vadd.f32 %v2464, %v2700
      %v2702 = vpop.f32.mrb[0].mxu0
      %2703 = vmatprep.mubr.f32.mxu0 0.0
      %2704 = vmatmul.mubr.f32.gmra.mrb[0].mxu0 %v2528
      %v2705 = vpop.f32.mrb[0].mxu0
      %v2706 = vadd.f32 %v2464, %v2705
      %v2707 = vpop.f32.mrb[0].mxu0
      %2708 = vmatprep.mubr.f32.mxu0 0.0
      %2709 = vmatmul.mubr.f32.gmra.mrb[0].mxu0 %v2531
      %v2710 = vpop.f32.mrb[0].mxu0
      %v2711 = vadd.f32 %v2464, %v2710
      %v2712 = vpop.f32.mrb[0].mxu0
      %2713 = vmatprep.mubr.f32.mxu0 0.0
      %2714 = vmatmul.mubr.f32.gmra.mrb[0].mxu0 %v2534
      %v2715 = vpop.f32.mrb[0].mxu0
      %v2716 = vadd.f32 %v2464, %v2715
      %v2717 = vpop.f32.mrb[0].mxu0
      %2718 = vmatprep.mubr.f32.mxu0 0.0
      %2719 = vmatmul.mubr.f32.gmra.mrb[0].mxu0 %v2537
      %v2720 = vpop.f32.mrb[0].mxu0
      %v2721 = vadd.f32 %v2464, %v2720
      %v2722 = vpop.f32.mrb[0].mxu0
      %2723 = vdwg.mxu0
      %vm2724 = vcmask 64512
      %2725 = vst.msk [vmem:[%s370] sm:$0xff] %vm2724, %v2606
      %2726 = vst.msk [vmem:[%s370 + $0x8] sm:$0xff] %vm2724, %v2611
      %2727 = vst.msk [vmem:[%s370 + $0x10] sm:$0xff] %vm2724, %v2616
      %2728 = vst.msk [vmem:[%s370 + $0x18] sm:$0xff] %vm2724, %v2621
      %2729 = vst.msk [vmem:[%s370 + $0x20] sm:$0xff] %vm2724, %v2626
      %2730 = vst.msk [vmem:[%s370 + $0x28] sm:$0xff] %vm2724, %v2631
      %2731 = vst.msk [vmem:[%s370 + $0x30] sm:$0xff] %vm2724, %v2636
      %2732 = vst.msk [vmem:[%s370 + $0x38] sm:$0xff] %vm2724, %v2641
      %2733 = vst.msk [vmem:[%s370 + $0x40] sm:$0xff] %vm2724, %v2646
      %2734 = vst.msk [vmem:[%s370 + $0x48] sm:$0xff] %vm2724, %v2651
      %2735 = vst.msk [vmem:[%s370 + $0x50] sm:$0xff] %vm2724, %v2656
      %2736 = vst.msk [vmem:[%s370 + $0x58] sm:$0xff] %vm2724, %v2661
      %2737 = vst.msk [vmem:[%s370 + $0x60] sm:$0xff] %vm2724, %v2666
      %2738 = vst.msk [vmem:[%s370 + $0x68] sm:$0xff] %vm2724, %v2671
      %2739 = vst.msk [vmem:[%s370 + $0x70] sm:$0xff] %vm2724, %v2676
      %2740 = vst.msk [vmem:[%s370 + $0x78] sm:$0xff] %vm2724, %v2681
      %2741 = vst.msk [vmem:[%s370 + $0x80] sm:$0xff] %vm2724, %v2686
      %2742 = vst.msk [vmem:[%s370 + $0x88] sm:$0xff] %vm2724, %v2691
      %2743 = vst.msk [vmem:[%s370 + $0x90] sm:$0xff] %vm2724, %v2696
      %2744 = vst.msk [vmem:[%s370 + $0x98] sm:$0xff] %vm2724, %v2701
      %2745 = vst.msk [vmem:[%s370 + $0xa0] sm:$0xff] %vm2724, %v2706
      %2746 = vst.msk [vmem:[%s370 + $0xa8] sm:$0xff] %vm2724, %v2711
      %2747 = vst.msk [vmem:[%s370 + $0xb0] sm:$0xff] %vm2724, %v2716
      %2748 = vst.msk [vmem:[%s370 + $0xb8] sm:$0xff] %vm2724, %v2721
      %s2749 = smul.u32 8, %s25
      %p2750 = scmp.lt.s32.totalorder %s24, 1
      %s2751 = scalar_select %p2750, %s24, 1
      %p2752 = scmp.lt.s32.totalorder %s2749, 15
      %s2753 = scalar_select %p2752, %s2749, 15
      %s2754 = smul.addr %s2753, 3
      %s2755 = smul.addr %s2751, 48
      %s2756 = sadd.s32 %s2754, %s2755
      %s2757 = smul.addr %s2756, 8
      %s2758 = scalar_lea.vmem %s9, %s2757
      // Predicated region
      $region57: #{tpu_custom_call.1} parent=55 // pred_check
        %p2759 = pneg %p248
      $region58: #{tpu_custom_call.1} parent=55 // pred_check_branch
        %2761 = sbr.rel (%p2759) target = $region60
      $region59: #{tpu_custom_call.1} parent=55 // pred_region
        %s2762 = smul.u32 8, %s25
      $region60: #{tpu_custom_call.1} parent=55 // pred_fallthru
        _
    $region56: #{tpu_custom_call.1} parent=5 // pred_fallthru
      _
    %p2763 = scmp.le.s32.totalorder 2, %s15
    // Predicated region
    $region61: #{tpu_custom_call.1} parent=5 // pred_check
      %p2764 = pneg %p2763
    $region62: #{tpu_custom_call.1} parent=5 // pred_check_branch
      %2766 = sbr.rel (%p2764) target = $region64
    $region63: #{tpu_custom_call.1} parent=5 // pred_region
      %s2767 = ssub.s32 %s15, 2
      // Predicated region
      $region65: #{tpu_custom_call.1} parent=63 // pred_check
        %p2768 = pneg %p254
      $region66: #{tpu_custom_call.1} parent=63 // pred_check_branch
        %2770 = sbr.rel (%p2768) target = $region68
      $region67: #{tpu_custom_call.1} parent=63 // pred_region
        %s2771 = smul.u32 8, %s27
        %p2772 = scmp.lt.s32.totalorder %s26, 1
        %s2773 = scalar_select %p2772, %s26, 1
        %p2774 = scmp.lt.s32.totalorder %s2771, 15
        %s2775 = scalar_select %p2774, %s2771, 15
        %s2776 = smul.addr %s2775, 3
        %s2777 = smul.addr %s2773, 48
        %s2778 = sadd.s32 %s2776, %s2777
        %s2779 = smul.addr %s2778, 8
        %s2780 = scalar_lea.vmem %s9, %s2779
      $region68: #{tpu_custom_call.1} parent=63 // pred_fallthru
        _
    $region64: #{tpu_custom_call.1} parent=5 // pred_fallthru
      _
  $region6: #{tpu_custom_call.1} parent=0 // loop_footer
    %s19 = sadd.s32 1, %s15
  $region7: #{tpu_custom_call.1} parent=0 // loop_footer_branch
    %14 = sbr.rel target = $region3
  $region8: #{tpu_custom_call.1} parent=0 // loop_exit
    _

</llo_original>
